<compile_context>
chip_gen: v7x
topology: tpu7x:2x2x1
jax: 0.10.0
libtpu: 0.0.40
codegen_flags: <defaults>
</compile_context>

<pallas_src>
import math
import jax
import jax.numpy as jnp
from jax.experimental import pallas as pl
from jax.experimental.pallas import tpu as pltpu


def _round_up(x, m):
    return ((x + m - 1) // m) * m


def make_kernel(b_tile, T, E, C_pad, k_max):
    BT = b_tile * T

    def kernel(x_ref, lens_ref, wf_ref, bf_ref, aw_ref, ab_ref, cw_ref, cb_ref,
               out_ref):
        x = x_ref[...]                                     # (b_tile, T_pad, E) bf16

        # Multi-size conv bank: per-tap accumulating matmuls.  Weights are fused /
        # zero-padded per tap in the wrapper; accumulation stays f32 on the MXU.
        acc = jnp.zeros((BT, C_pad), jnp.float32)
        for j in range(k_max):                             # static unroll, k_max small
            tap = x[:, j:j + T, :].reshape(BT, E)          # bf16
            acc = acc + jnp.dot(tap, wf_ref[j],
                                preferred_element_type=jnp.float32)
        conv = jnp.maximum(acc + bf_ref[...], 0.0)         # ReLU(conv + bias), (BT, C_pad) f32

        # attention with context
        att = jnp.tanh(
            jnp.dot(conv.astype(jnp.bfloat16), aw_ref[...],
                    preferred_element_type=jnp.float32) + ab_ref[...])       # (BT, C_pad)
        # N=1 context projection: lane-wise multiply + XLU reduce (keeps the MXU free)
        ctx = jnp.sum(att * cw_ref[...], axis=-1, keepdims=True) + cb_ref[...]  # (BT, 1)

        # masked-softmax numerator (matches torch _masked_softmax: exp, no max-shift)
        score = jnp.exp(ctx)                               # (BT, 1) f32

        # block-diagonal selector with the length mask folded in:
        #   sel[b, r] = 1 iff flat row r belongs to batch row b AND (r - b*T) < len[b]
        row = jax.lax.broadcasted_iota(jnp.int32, (b_tile, BT), 0)
        col = jax.lax.broadcasted_iota(jnp.int32, (b_tile, BT), 1)
        t = col - row * T
        sel = ((t >= 0) & (t < T) & (t < lens_ref[...])).astype(jnp.float32)
        sel = sel.astype(jnp.bfloat16)                     # exact (0/1 values)

        # segment reductions over T on the MXU:
        #   denom[b]  = sum_{t < len[b]} exp(ctx[b, t])
        #   num[b, :] = sum_{t < len[b]} exp(ctx[b, t]) * conv[b, t, :]
        denom = jnp.dot(sel, score.astype(jnp.bfloat16),
                        preferred_element_type=jnp.float32)                 # (b_tile, 1)
        num = jnp.dot(sel, (score * conv).astype(jnp.bfloat16),
                      preferred_element_type=jnp.float32)                   # (b_tile, C_pad)

        out_ref[...] = num * pl.reciprocal(denom, approx=True)

    return kernel


def token_note_encoder_cnn(tokens, note_lengths, params, kernel_sizes, filter_num):
    embed = params["embed"]
    V, E = embed.shape
    B, T = tokens.shape
    F = filter_num
    C = F * len(kernel_sizes)
    # torch.cat over conv outputs requires equal lengths; with padding=k//2 that means odd k.
    assert all(k % 2 == 1 for k in kernel_sizes), "kernel sizes must be odd"
    max_pad = max(k // 2 for k in kernel_sizes)
    k_max = max(kernel_sizes)
    C_pad = _round_up(C, 128)                       # lane-dense channels (zero-padded, inert)
    T_pad = _round_up(T + 2 * max_pad, 8)           # sublane-friendly padded time axis

    # ---- per-generation VMEM budget --------------------------------------------------
    try:
        vmem_cap = int(pltpu.get_tpu_info().vmem_capacity_bytes)
    except Exception:
        vmem_cap = 64 * 1024 * 1024                 # conservative (v7x per-TC) fallback
    vmem_limit = min((3 * vmem_cap) // 4, 96 * 1024 * 1024)  # ~96 MiB v5e/v6e, ~48 MiB v7x
    tile_budget = vmem_limit // 3

    def tile_bytes(bt):
        rows = bt * T
        return (2 * 2 * bt * T_pad * E                                  # bf16 x block (2 bufs)
                + 4 * rows * C_pad * 4                                  # f32 conv/att/temps
                + 2 * bt * rows                                         # bf16 selector
                + 2 * 2 * (k_max * E * C_pad + C_pad * C_pad + 4 * C_pad)  # weights (2 bufs)
                + 2 * 4 * bt * C_pad)                                   # f32 output (2 bufs)

    # batch tile: aim for ~2k MXU rows, clamp to the VMEM budget, keep >= 2 grid steps
    # (when B allows) so the "parallel" grid axis can shard over both v7x TensorCores.
    b_tile = max(8, min(256, _round_up(max(1, 2048 // max(T, 1)), 8)))
    b_tile = min(b_tile, _round_up(B, 8))
    while b_tile > 8 and tile_bytes(b_tile) > tile_budget:
        b_tile -= 8
    if B > 8 and b_tile >= B:
        b_tile = min(b_tile, _round_up((B + 1) // 2, 8))
    B_pad = _round_up(B, b_tile)

    # ---- glue (plain JAX): embedding gather straight into the padded bf16 layout ----
    # Pad-token id V indexes an appended all-zero embedding row, so the conv zero
    # padding, the 8-aligned T_pad tail, and the padded batch rows all fall out of the
    # gather; no second full-size pad/copy of the activation through HBM.
    # TODO(synk): train-mode word dropout not implemented (eval: identity).
    # TODO(synk): gather could be fused via scalar-prefetched tokens + DMA from an HBM
    #             embed table; with E * 2 bytes << 512 the bf16 cast is the better fix.
    embed_ext = jnp.concatenate(
        [embed, jnp.zeros((1, E), embed.dtype)], axis=0).astype(jnp.bfloat16)
    tok_p = jnp.full((B_pad, T_pad), V, dtype=jnp.int32)
    tok_p = tok_p.at[:B, max_pad:max_pad + T].set(tokens.astype(jnp.int32))
    x_pad = embed_ext[tok_p]                               # (B_pad, T_pad, E) bf16

    # note lengths as a (B_pad, 1) int32 column (padded rows get len=T: keeps denom > 0)
    lens_col = jnp.full((B_pad, 1), T, dtype=jnp.int32)
    lens_col = lens_col.at[:B, 0].set(note_lengths.astype(jnp.int32))

    # ---- fuse all conv-bank weights into one (k_max, E, C_pad) bank (zero-padded) ----
    W_fused = jnp.zeros((k_max, E, C_pad), jnp.float32)
    b_fused = jnp.zeros((1, C_pad), jnp.float32)
    for ci, k in enumerate(kernel_sizes):
        off = max_pad - k // 2
        W_fused = W_fused.at[off:off + k, :, ci * F:(ci + 1) * F].set(params[f"conv_w_{k}"])
        b_fused = b_fused.at[:, ci * F:(ci + 1) * F].set(params[f"conv_b_{k}"])
    W_fused = W_fused.astype(jnp.bfloat16)

    # attention params, zero-padded to C_pad lanes (bf16 matmul weights, f32 biases)
    att_w = jnp.zeros((C_pad, C_pad), jnp.float32).at[:C, :C].set(params["att_w"])
    att_w = att_w.astype(jnp.bfloat16)
    att_b = jnp.zeros((1, C_pad), jnp.float32).at[:, :C].set(params["att_b"])
    ctx_w = jnp.zeros((1, C_pad), jnp.float32).at[:, :C].set(params["ctx_w"].T)
    ctx_b = params["ctx_b"].astype(jnp.float32)            # (1, 1)

    kern = make_kernel(b_tile, T, E, C_pad, k_max)

    in_specs = [
        pl.BlockSpec((b_tile, T_pad, E), lambda i: (i, 0, 0)),    # x (padded, bf16)
        pl.BlockSpec((b_tile, 1), lambda i: (i, 0)),              # note lengths (int32)
        pl.BlockSpec((k_max, E, C_pad), lambda i: (0, 0, 0)),     # fused conv W (bf16)
        pl.BlockSpec((1, C_pad), lambda i: (0, 0)),               # fused conv b (f32)
        pl.BlockSpec((C_pad, C_pad), lambda i: (0, 0)),           # attention W (bf16)
        pl.BlockSpec((1, C_pad), lambda i: (0, 0)),               # attention b (f32)
        pl.BlockSpec((1, C_pad), lambda i: (0, 0)),               # context W row (f32)
        pl.BlockSpec((1, 1), lambda i: (0, 0)),                   # context b (f32)
    ]

    out = pl.pallas_call(
        kern,
        out_shape=jax.ShapeDtypeStruct((B_pad, C_pad), jnp.float32),
        grid=(B_pad // b_tile,),
        in_specs=in_specs,
        out_specs=pl.BlockSpec((b_tile, C_pad), lambda i: (i, 0)),
        compiler_params=pltpu.CompilerParams(
            dimension_semantics=("parallel",),                    # v7x: shard batch over 2 TCs
            vmem_limit_bytes=vmem_limit),
    )(x_pad, lens_col, W_fused, b_fused, att_w, att_b, ctx_w, ctx_b)

    return out[:B, :C]


def reference(tokens, note_lengths, params, kernel_sizes, filter_num):
    """Independent plain-JAX f32 reference (uses lax.conv_general_dilated)."""
    x = params["embed"][tokens]                            # (B, T, E)
    B, T, _ = x.shape
    feats = []
    for k in kernel_sizes:
        w = params[f"conv_w_{k}"]                          # (k, E, F) == WIO
        bb = params[f"conv_b_{k}"]                         # (1, F)
        pad = k // 2
        co = jax.lax.conv_general_dilated(
            x, w, window_strides=(1,), padding=[(pad, pad)],
            dimension_numbers=("NWC", "WIO", "NWC"))
        feats.append(jax.nn.relu(co + bb[None]))
    co = jnp.concatenate(feats, axis=-1)                   # (B, T, C)
    att = jnp.tanh(co @ params["att_w"] + params["att_b"])
    ctx = (att @ params["ctx_w"] + params["ctx_b"])[..., 0]  # (B, T)
    mask = (jnp.arange(T)[None, :] < note_lengths[:, None]).astype(jnp.float32)
    score = jnp.exp(ctx) * mask
    dist = score / jnp.sum(score, axis=-1, keepdims=True)
    return jnp.sum(dist[..., None] * co, axis=1)


if __name__ == "__main__":
    # small, module-consistent shapes
    vocab_size = 50
    embed_dim = 32          # E
    filter_num = 8          # F per kernel size
    kernel_sizes = [3, 5]   # filter_sizes = "3,5"
    B, T = 2, 16
    C = filter_num * len(kernel_sizes)   # encode_dim = 16

    key = jax.random.PRNGKey(0)
    ks = jax.random.split(key, 12)

    def xavier(k, shape):
        fan_in, fan_out = shape[0], shape[-1]
        lim = math.sqrt(6.0 / (fan_in + fan_out))
        return jax.random.uniform(k, shape, jnp.float32, -lim, lim)

    params = {
        "embed": jax.random.normal(ks[0], (vocab_size, embed_dim), jnp.float32),
        "att_w": xavier(ks[1], (C, C)),                    # Linear(C -> C), transposed for x@W
        "att_b": 0.01 * jax.random.normal(ks[2], (1, C), jnp.float32),
        "ctx_w": xavier(ks[3], (C, 1)),                    # Linear(C -> 1), transposed
        "ctx_b": 0.01 * jax.random.normal(ks[4], (1, 1), jnp.float32),
    }
    for i, k in enumerate(kernel_sizes):
        # PyTorch Conv1d weight is (F, E, k); kernel uses (k, E, F) = transpose(w, (2,1,0))
        fan_in = embed_dim * k
        std = 1.0 / math.sqrt(fan_in)
        params[f"conv_w_{k}"] = std * jax.random.normal(
            ks[5 + 2 * i], (k, embed_dim, filter_num), jnp.float32)
        params[f"conv_b_{k}"] = std * jax.random.normal(
            ks[6 + 2 * i], (1, filter_num), jnp.float32)

    tokens = jax.random.randint(ks[11], (B, T), 0, vocab_size, jnp.int32)
    note_lengths = jnp.array([T, 9], dtype=jnp.int32)

    out = token_note_encoder_cnn(tokens, note_lengths, params, kernel_sizes, filter_num)
    out = jax.block_until_ready(out)

    ref = reference(tokens, note_lengths, params, kernel_sizes, filter_num)
    assert out.shape == (B, C)
    # bf16 activations/weights + approx reciprocal -> loosened tolerance vs. f32 reference
    assert jnp.allclose(out, ref, rtol=3e-2, atol=2e-2), (out, ref)

    print("KERNEL_OK")
</pallas_src>

<mosaic_0001>
module attributes {stable_mosaic.version = 11 : i64} {
  func.func @kernel(%arg0: i32, %arg1: memref<8x24x32xbf16, #tpu.memory_space<vmem>>, %arg2: memref<8x1xi32, #tpu.memory_space<vmem>>, %arg3: memref<5x32x128xbf16, #tpu.memory_space<vmem>>, %arg4: memref<1x128xf32, #tpu.memory_space<vmem>>, %arg5: memref<128x128xbf16, #tpu.memory_space<vmem>>, %arg6: memref<1x128xf32, #tpu.memory_space<vmem>>, %arg7: memref<1x128xf32, #tpu.memory_space<vmem>>, %arg8: memref<1x1xf32, #tpu.memory_space<vmem>>, %arg9: memref<8x128xf32, #tpu.memory_space<vmem>>) attributes {dimension_semantics = [#tpu.dimension_semantics<parallel>], iteration_bounds = array<i64: 1>, scalar_prefetch = 0 : i64, scratch_operands = 0 : i64, tpu.core_type = #tpu.core_type<tc>, window_params = [{transform_indices = @transform_0, window_bounds = array<i64: 8, 24, 32>}, {transform_indices = @transform_1, window_bounds = array<i64: 8, 1>}, {pipeline_mode = #tpu.pipeline_mode<synchronous>, transform_indices = @transform_2, window_bounds = array<i64: 5, 32, 128>}, {pipeline_mode = #tpu.pipeline_mode<synchronous>, transform_indices = @transform_3, window_bounds = array<i64: 1, 128>}, {pipeline_mode = #tpu.pipeline_mode<synchronous>, transform_indices = @transform_4, window_bounds = array<i64: 128, 128>}, {pipeline_mode = #tpu.pipeline_mode<synchronous>, transform_indices = @transform_5, window_bounds = array<i64: 1, 128>}, {pipeline_mode = #tpu.pipeline_mode<synchronous>, transform_indices = @transform_6, window_bounds = array<i64: 1, 128>}, {pipeline_mode = #tpu.pipeline_mode<synchronous>, transform_indices = @transform_7, window_bounds = array<i64: 1, 1>}, {transform_indices = @transform_8, window_bounds = array<i64: 8, 128>}]} {
    %c0 = arith.constant 0 : index
    %c0_0 = arith.constant 0 : index
    %c0_1 = arith.constant 0 : index
    %0 = vector.load %arg1[%c0, %c0_0, %c0_1] : memref<8x24x32xbf16, #tpu.memory_space<vmem>>, vector<8x24x32xbf16>
    %cst = arith.constant 0.000000e+00 : f32
    %1 = vector.broadcast %cst : f32 to vector<128x128xf32>
    %2 = vector.extract_strided_slice %0 {offsets = [0, 0, 0], sizes = [8, 16, 32], strides = [1, 1, 1]} : vector<8x24x32xbf16> to vector<8x16x32xbf16>
    %3 = vector.shape_cast %2 : vector<8x16x32xbf16> to vector<128x32xbf16>
    %c0_2 = arith.constant 0 : index
    %c0_3 = arith.constant 0 : index
    %c0_4 = arith.constant 0 : index
    %4 = vector.load %arg3[%c0_2, %c0_3, %c0_4] : memref<5x32x128xbf16, #tpu.memory_space<vmem>>, vector<1x32x128xbf16>
    %5 = vector.shape_cast %4 : vector<1x32x128xbf16> to vector<32x128xbf16>
    %cst_5 = arith.constant dense<0.000000e+00> : vector<128x128xf32>
    %6 = tpu.matmul %3, %5, %cst_5 {dimension_numbers = #tpu.dot_dimension_numbers<[1], [0], [0], [1], [0, 0, 1, 1], [], []>} : vector<128x32xbf16>, vector<32x128xbf16>, vector<128x128xf32> -> vector<128x128xf32>
    %7 = arith.addf %1, %6 : vector<128x128xf32>
    %8 = vector.extract_strided_slice %0 {offsets = [0, 1, 0], sizes = [8, 16, 32], strides = [1, 1, 1]} : vector<8x24x32xbf16> to vector<8x16x32xbf16>
    %9 = vector.shape_cast %8 : vector<8x16x32xbf16> to vector<128x32xbf16>
    %c1 = arith.constant 1 : index
    %c0_6 = arith.constant 0 : index
    %c0_7 = arith.constant 0 : index
    %10 = vector.load %arg3[%c1, %c0_6, %c0_7] : memref<5x32x128xbf16, #tpu.memory_space<vmem>>, vector<1x32x128xbf16>
    %11 = vector.shape_cast %10 : vector<1x32x128xbf16> to vector<32x128xbf16>
    %cst_8 = arith.constant dense<0.000000e+00> : vector<128x128xf32>
    %12 = tpu.matmul %9, %11, %cst_8 {dimension_numbers = #tpu.dot_dimension_numbers<[1], [0], [0], [1], [0, 0, 1, 1], [], []>} : vector<128x32xbf16>, vector<32x128xbf16>, vector<128x128xf32> -> vector<128x128xf32>
    %13 = arith.addf %7, %12 : vector<128x128xf32>
    %14 = vector.extract_strided_slice %0 {offsets = [0, 2, 0], sizes = [8, 16, 32], strides = [1, 1, 1]} : vector<8x24x32xbf16> to vector<8x16x32xbf16>
    %15 = vector.shape_cast %14 : vector<8x16x32xbf16> to vector<128x32xbf16>
    %c2 = arith.constant 2 : index
    %c0_9 = arith.constant 0 : index
    %c0_10 = arith.constant 0 : index
    %16 = vector.load %arg3[%c2, %c0_9, %c0_10] : memref<5x32x128xbf16, #tpu.memory_space<vmem>>, vector<1x32x128xbf16>
    %17 = vector.shape_cast %16 : vector<1x32x128xbf16> to vector<32x128xbf16>
    %cst_11 = arith.constant dense<0.000000e+00> : vector<128x128xf32>
    %18 = tpu.matmul %15, %17, %cst_11 {dimension_numbers = #tpu.dot_dimension_numbers<[1], [0], [0], [1], [0, 0, 1, 1], [], []>} : vector<128x32xbf16>, vector<32x128xbf16>, vector<128x128xf32> -> vector<128x128xf32>
    %19 = arith.addf %13, %18 : vector<128x128xf32>
    %20 = vector.extract_strided_slice %0 {offsets = [0, 3, 0], sizes = [8, 16, 32], strides = [1, 1, 1]} : vector<8x24x32xbf16> to vector<8x16x32xbf16>
    %21 = vector.shape_cast %20 : vector<8x16x32xbf16> to vector<128x32xbf16>
    %c3 = arith.constant 3 : index
    %c0_12 = arith.constant 0 : index
    %c0_13 = arith.constant 0 : index
    %22 = vector.load %arg3[%c3, %c0_12, %c0_13] : memref<5x32x128xbf16, #tpu.memory_space<vmem>>, vector<1x32x128xbf16>
    %23 = vector.shape_cast %22 : vector<1x32x128xbf16> to vector<32x128xbf16>
    %cst_14 = arith.constant dense<0.000000e+00> : vector<128x128xf32>
    %24 = tpu.matmul %21, %23, %cst_14 {dimension_numbers = #tpu.dot_dimension_numbers<[1], [0], [0], [1], [0, 0, 1, 1], [], []>} : vector<128x32xbf16>, vector<32x128xbf16>, vector<128x128xf32> -> vector<128x128xf32>
    %25 = arith.addf %19, %24 : vector<128x128xf32>
    %26 = vector.extract_strided_slice %0 {offsets = [0, 4, 0], sizes = [8, 16, 32], strides = [1, 1, 1]} : vector<8x24x32xbf16> to vector<8x16x32xbf16>
    %27 = vector.shape_cast %26 : vector<8x16x32xbf16> to vector<128x32xbf16>
    %c4 = arith.constant 4 : index
    %c0_15 = arith.constant 0 : index
    %c0_16 = arith.constant 0 : index
    %28 = vector.load %arg3[%c4, %c0_15, %c0_16] : memref<5x32x128xbf16, #tpu.memory_space<vmem>>, vector<1x32x128xbf16>
    %29 = vector.shape_cast %28 : vector<1x32x128xbf16> to vector<32x128xbf16>
    %cst_17 = arith.constant dense<0.000000e+00> : vector<128x128xf32>
    %30 = tpu.matmul %27, %29, %cst_17 {dimension_numbers = #tpu.dot_dimension_numbers<[1], [0], [0], [1], [0, 0, 1, 1], [], []>} : vector<128x32xbf16>, vector<32x128xbf16>, vector<128x128xf32> -> vector<128x128xf32>
    %31 = arith.addf %25, %30 : vector<128x128xf32>
    %c0_18 = arith.constant 0 : index
    %c0_19 = arith.constant 0 : index
    %32 = vector.load %arg4[%c0_18, %c0_19] : memref<1x128xf32, #tpu.memory_space<vmem>>, vector<1x128xf32>
    %33 = vector.broadcast %32 : vector<1x128xf32> to vector<128x128xf32>
    %34 = arith.addf %31, %33 : vector<128x128xf32>
    %cst_20 = arith.constant 0.000000e+00 : f32
    %35 = vector.broadcast %cst_20 : f32 to vector<128x128xf32>
    %36 = arith.maximumf %34, %35 : vector<128x128xf32>
    %37 = arith.truncf %36 : vector<128x128xf32> to vector<128x128xbf16>
    %c0_21 = arith.constant 0 : index
    %c0_22 = arith.constant 0 : index
    %38 = vector.load %arg5[%c0_21, %c0_22] : memref<128x128xbf16, #tpu.memory_space<vmem>>, vector<128x128xbf16>
    %cst_23 = arith.constant dense<0.000000e+00> : vector<128x128xf32>
    %39 = tpu.matmul %37, %38, %cst_23 {dimension_numbers = #tpu.dot_dimension_numbers<[1], [0], [0], [1], [0, 0, 1, 1], [], []>} : vector<128x128xbf16>, vector<128x128xbf16>, vector<128x128xf32> -> vector<128x128xf32>
    %c0_24 = arith.constant 0 : index
    %c0_25 = arith.constant 0 : index
    %40 = vector.load %arg6[%c0_24, %c0_25] : memref<1x128xf32, #tpu.memory_space<vmem>>, vector<1x128xf32>
    %41 = vector.broadcast %40 : vector<1x128xf32> to vector<128x128xf32>
    %42 = arith.addf %39, %41 : vector<128x128xf32>
    %43 = math.tanh %42 : vector<128x128xf32>
    %c0_26 = arith.constant 0 : index
    %c0_27 = arith.constant 0 : index
    %44 = vector.load %arg7[%c0_26, %c0_27] : memref<1x128xf32, #tpu.memory_space<vmem>>, vector<1x128xf32>
    %45 = vector.broadcast %44 : vector<1x128xf32> to vector<128x128xf32>
    %46 = arith.mulf %43, %45 : vector<128x128xf32>
    %cst_28 = arith.constant dense<0.000000e+00> : vector<128xf32>
    %47 = vector.multi_reduction <add>, %46, %cst_28 [1] : vector<128x128xf32> to vector<128xf32>
    %48 = vector.shape_cast %47 : vector<128xf32> to vector<128x1xf32>
    %c0_29 = arith.constant 0 : index
    %c0_30 = arith.constant 0 : index
    %49 = vector.load %arg8[%c0_29, %c0_30] : memref<1x1xf32, #tpu.memory_space<vmem>>, vector<1x1xf32>
    %50 = vector.broadcast %49 : vector<1x1xf32> to vector<128x1xf32>
    %51 = arith.addf %48, %50 : vector<128x1xf32>
    %52 = math.exp %51 : vector<128x1xf32>
    %53 = tpu.iota {dimensions = array<i32: 0>} : vector<8x128xi32>
    %54 = tpu.iota {dimensions = array<i32: 1>} : vector<8x128xi32>
    %c16_i32 = arith.constant 16 : i32
    %55 = vector.broadcast %c16_i32 : i32 to vector<8x128xi32>
    %56 = arith.muli %53, %55 : vector<8x128xi32>
    %57 = arith.subi %54, %56 : vector<8x128xi32>
    %c0_i32 = arith.constant 0 : i32
    %58 = vector.broadcast %c0_i32 : i32 to vector<8x128xi32>
    %59 = arith.cmpi sge, %57, %58 : vector<8x128xi32>
    %c16_i32_31 = arith.constant 16 : i32
    %60 = vector.broadcast %c16_i32_31 : i32 to vector<8x128xi32>
    %61 = arith.cmpi slt, %57, %60 : vector<8x128xi32>
    %62 = arith.andi %59, %61 : vector<8x128xi1>
    %c0_32 = arith.constant 0 : index
    %c0_33 = arith.constant 0 : index
    %63 = vector.load %arg2[%c0_32, %c0_33] : memref<8x1xi32, #tpu.memory_space<vmem>>, vector<8x1xi32>
    %64 = vector.broadcast %63 : vector<8x1xi32> to vector<8x128xi32>
    %65 = arith.cmpi slt, %57, %64 : vector<8x128xi32>
    %66 = arith.andi %62, %65 : vector<8x128xi1>
    %67 = arith.extui %66 : vector<8x128xi1> to vector<8x128xi32>
    %68 = arith.sitofp %67 : vector<8x128xi32> to vector<8x128xf32>
    %69 = arith.truncf %68 : vector<8x128xf32> to vector<8x128xbf16>
    %70 = arith.truncf %52 : vector<128x1xf32> to vector<128x1xbf16>
    %cst_34 = arith.constant dense<0.000000e+00> : vector<8x1xf32>
    %71 = tpu.matmul %69, %70, %cst_34 {dimension_numbers = #tpu.dot_dimension_numbers<[1], [0], [0], [1], [0, 0, 1, 1], [], []>} : vector<8x128xbf16>, vector<128x1xbf16>, vector<8x1xf32> -> vector<8x1xf32>
    %72 = vector.broadcast %52 : vector<128x1xf32> to vector<128x128xf32>
    %73 = arith.mulf %72, %36 : vector<128x128xf32>
    %74 = arith.truncf %73 : vector<128x128xf32> to vector<128x128xbf16>
    %cst_35 = arith.constant dense<0.000000e+00> : vector<8x128xf32>
    %75 = tpu.matmul %69, %74, %cst_35 {dimension_numbers = #tpu.dot_dimension_numbers<[1], [0], [0], [1], [0, 0, 1, 1], [], []>} : vector<8x128xbf16>, vector<128x128xbf16>, vector<8x128xf32> -> vector<8x128xf32>
    %76 = tpu.reciprocal %71 {approx = true} : vector<8x1xf32> -> vector<8x1xf32>
    %77 = vector.broadcast %76 : vector<8x1xf32> to vector<8x128xf32>
    %78 = arith.mulf %75, %77 : vector<8x128xf32>
    %c0_36 = arith.constant 0 : index
    %c0_37 = arith.constant 0 : index
    %79 = vector.load %arg9[%c0_36, %c0_37] : memref<8x128xf32, #tpu.memory_space<vmem>>, vector<8x128xf32>
    tpu.vector_store %arg9[%c0_36, %c0_37], %78 {strides = array<i32>} : memref<8x128xf32, #tpu.memory_space<vmem>>, vector<8x128xf32>,
    return
  }
  func.func @transform_0(%arg0: i32) -> (i32, i32, i32) {
    %c0_i32 = arith.constant 0 : i32
    %c0_i32_0 = arith.constant 0 : i32
    %c0_i32_1 = arith.constant 0 : i32
    return %arg0, %c0_i32, %c0_i32_0 : i32, i32, i32
  }
  func.func @transform_1(%arg0: i32) -> (i32, i32) {
    %c0_i32 = arith.constant 0 : i32
    %c0_i32_0 = arith.constant 0 : i32
    return %arg0, %c0_i32 : i32, i32
  }
  func.func @transform_2(%arg0: i32) -> (i32, i32, i32) {
    %c0_i32 = arith.constant 0 : i32
    %c0_i32_0 = arith.constant 0 : i32
    %c0_i32_1 = arith.constant 0 : i32
    %c0_i32_2 = arith.constant 0 : i32
    return %c0_i32, %c0_i32_0, %c0_i32_1 : i32, i32, i32
  }
  func.func @transform_3(%arg0: i32) -> (i32, i32) {
    %c0_i32 = arith.constant 0 : i32
    %c0_i32_0 = arith.constant 0 : i32
    %c0_i32_1 = arith.constant 0 : i32
    return %c0_i32, %c0_i32_0 : i32, i32
  }
  func.func @transform_4(%arg0: i32) -> (i32, i32) {
    %c0_i32 = arith.constant 0 : i32
    %c0_i32_0 = arith.constant 0 : i32
    %c0_i32_1 = arith.constant 0 : i32
    return %c0_i32, %c0_i32_0 : i32, i32
  }
  func.func @transform_5(%arg0: i32) -> (i32, i32) {
    %c0_i32 = arith.constant 0 : i32
    %c0_i32_0 = arith.constant 0 : i32
    %c0_i32_1 = arith.constant 0 : i32
    return %c0_i32, %c0_i32_0 : i32, i32
  }
  func.func @transform_6(%arg0: i32) -> (i32, i32) {
    %c0_i32 = arith.constant 0 : i32
    %c0_i32_0 = arith.constant 0 : i32
    %c0_i32_1 = arith.constant 0 : i32
    return %c0_i32, %c0_i32_0 : i32, i32
  }
  func.func @transform_7(%arg0: i32) -> (i32, i32) {
    %c0_i32 = arith.constant 0 : i32
    %c0_i32_0 = arith.constant 0 : i32
    %c0_i32_1 = arith.constant 0 : i32
    return %c0_i32, %c0_i32_0 : i32, i32
  }
  func.func @transform_8(%arg0: i32) -> (i32, i32) {
    %c0_i32 = arith.constant 0 : i32
    %c0_i32_0 = arith.constant 0 : i32
    return %arg0, %c0_i32 : i32, i32
  }
}

</mosaic_0001>

<llo_original>
// kernel: tpu_custom_call.1
$region0: #{tpu_custom_call.1}
  #allocation0 [shape = 'u32[]', space=smem, size = 0x4, offset = 0x4, fixed_abs, tag = 'smem constant byte address 0x4 - core index']
  #allocation1 [shape = 'u32[144,128]{1,0:T(1,128)}', space=vmem, size = 0x12000, scoped, tag = 'internal scratch']
  #allocation2 [shape = 'f32[1,1]{1,0:T(1,128)S(1)}', space=vmem, size = 0x200, scoped, tag = 'scoped memory for tpu_custom_call.1']
  %s0 = inlined_call_operand.hbm [shape: bf16[8,24,32], index: 0, kind: input, shape index: {}]
  %s1 = inlined_call_operand.vmem [shape: s32[8,1], index: 1, kind: input, shape index: {}]
  %s2 = inlined_call_operand.hbm [shape: bf16[5,32,128], index: 2, kind: input, shape index: {}]
  %s3 = inlined_call_operand.vmem [shape: f32[1,128], index: 3, kind: input, shape index: {}]
  %s4 = inlined_call_operand.hbm [shape: bf16[128,128], index: 4, kind: input, shape index: {}]
  %s5 = inlined_call_operand.vmem [shape: f32[1,128], index: 5, kind: input, shape index: {}]
  %s6 = inlined_call_operand.vmem [shape: f32[1,128], index: 6, kind: input, shape index: {}]
  %s7 = inlined_call_operand.<no memory space> [shape: f32[1,1], index: 7, kind: input, shape index: {}]
  %s8 = inlined_call_operand.hbm [shape: f32[8,128], index: 8, kind: output, shape index: {}]
  %s9 = sld [smem:[#allocation0]]
  $region54: #{tpu_custom_call.1} parent=0
    _
  %s11 = ssub.s32 1, %s9
  %s12 = scalar_select 0, %s11, %s9
  %v13 = vstv %s7
  %14 = vst [vmem:[#allocation2] sm:$0x1] %v13
  $region1: #{tpu_custom_call.1} parent=0
    #allocation3 [shape = 'u8[49152]{0}', space=vmem, size = 0xc000, scoped, tag = 'input window, operand 0, single buffered']
    #allocation4 [shape = 's32[1]{0}', space=sflag, size = 0x4, scoped, tag = 'scoped memory for tpu_custom_call.1']
    #allocation5 [shape = 's32[1]{0}', space=sflag, size = 0x4, scoped, tag = 'scoped memory for tpu_custom_call.1']
    #allocation6 [shape = 'u8[40960]{0}', space=vmem, size = 0xa000, scoped, tag = 'input window, operand 2, single buffered']
    #allocation7 [shape = 's32[1]{0}', space=sflag, size = 0x4, scoped, tag = 'scoped memory for tpu_custom_call.1']
    #allocation8 [shape = 'u8[32768]{0}', space=vmem, size = 0x8000, scoped, tag = 'input window, operand 4, single buffered']
    #allocation9 [shape = 'u8[4096]{0}', space=vmem, size = 0x1000, scoped, tag = 'output window, operand 0, single buffered']
    %15 = vsyncpa [#allocation4], 0
    %16 = vsyncpa [#allocation7], 0
    %17 = vsyncpa [#allocation5], 0
    // Predicated region
    $region2: #{tpu_custom_call.1} parent=1 // pred_check
      _
    $region3: #{tpu_custom_call.1} parent=1 // pred_check_branch
      %19 = sbr.rel (0) target = $region5
    $region4: #{tpu_custom_call.1} parent=1 // pred_region
      %s21 = ssub.s32 1536, 1536
      %22 = vsyncadd [#allocation4], %s21
      %s23 = sshll.u32 [#allocation3], 4
      %s24 = int_to_ptr.vmem [resolvable:$true] %s23
      %29 = dma.hbm_to_vmem [thread:$0]  %s0, 1536, %s24, [#allocation4], 64, 64, 4
    $region5: #{tpu_custom_call.1} parent=1 // pred_fallthru
      _
    // Predicated region
    $region6: #{tpu_custom_call.1} parent=1 // pred_check
      _
    $region7: #{tpu_custom_call.1} parent=1 // pred_check_branch
      %31 = sbr.rel (0) target = $region9
    $region8: #{tpu_custom_call.1} parent=1 // pred_region
      _
    $region9: #{tpu_custom_call.1} parent=1 // pred_fallthru
      _
    // Predicated region
    $region10: #{tpu_custom_call.1} parent=1 // pred_check
      _
    $region11: #{tpu_custom_call.1} parent=1 // pred_check_branch
      %33 = sbr.rel (0) target = $region13
    $region12: #{tpu_custom_call.1} parent=1 // pred_region
      %s35 = ssub.s32 1280, 1280
      %36 = vsyncadd [#allocation7], %s35
      %s37 = sshll.u32 [#allocation6], 4
      %s38 = int_to_ptr.vmem [resolvable:$true] %s37
      %43 = dma.hbm_to_vmem [thread:$0]  %s2, 1280, %s38, [#allocation7], 64, 64, 4
    $region13: #{tpu_custom_call.1} parent=1 // pred_fallthru
      _
    // Predicated region
    $region14: #{tpu_custom_call.1} parent=1 // pred_check
      _
    $region15: #{tpu_custom_call.1} parent=1 // pred_check_branch
      %45 = sbr.rel (0) target = $region17
    $region16: #{tpu_custom_call.1} parent=1 // pred_region
      _
    $region17: #{tpu_custom_call.1} parent=1 // pred_fallthru
      _
    // Predicated region
    $region18: #{tpu_custom_call.1} parent=1 // pred_check
      _
    $region19: #{tpu_custom_call.1} parent=1 // pred_check_branch
      %47 = sbr.rel (0) target = $region21
    $region20: #{tpu_custom_call.1} parent=1 // pred_region
      %s49 = ssub.s32 1024, 1024
      %50 = vsyncadd [#allocation7], %s49
      %s51 = sshll.u32 [#allocation8], 4
      %s52 = int_to_ptr.vmem [resolvable:$true] %s51
      %57 = dma.hbm_to_vmem [thread:$0]  %s4, 1024, %s52, [#allocation7], 64, 64, 4
    $region21: #{tpu_custom_call.1} parent=1 // pred_fallthru
      _
    // Predicated region
    $region22: #{tpu_custom_call.1} parent=1 // pred_check
      _
    $region23: #{tpu_custom_call.1} parent=1 // pred_check_branch
      %59 = sbr.rel (0) target = $region25
    $region24: #{tpu_custom_call.1} parent=1 // pred_region
      _
    $region25: #{tpu_custom_call.1} parent=1 // pred_fallthru
      _
    // Predicated region
    $region26: #{tpu_custom_call.1} parent=1 // pred_check
      _
    $region27: #{tpu_custom_call.1} parent=1 // pred_check_branch
      %61 = sbr.rel (0) target = $region29
    $region28: #{tpu_custom_call.1} parent=1 // pred_region
      _
    $region29: #{tpu_custom_call.1} parent=1 // pred_fallthru
      _
    // Predicated region
    $region30: #{tpu_custom_call.1} parent=1 // pred_check
      _
    $region31: #{tpu_custom_call.1} parent=1 // pred_check_branch
      %63 = sbr.rel (0) target = $region33
    $region32: #{tpu_custom_call.1} parent=1 // pred_region
      _
    $region33: #{tpu_custom_call.1} parent=1 // pred_fallthru
      _
    // Predicated region
    $region34: #{tpu_custom_call.1} parent=1 // pred_check
      _
    $region35: #{tpu_custom_call.1} parent=1 // pred_check_branch
      %65 = sbr.rel (0) target = $region37
    $region36: #{tpu_custom_call.1} parent=1 // pred_region
      %66 = dma.done [#allocation4], 1536
    $region37: #{tpu_custom_call.1} parent=1 // pred_fallthru
      _
    // Predicated region
    $region38: #{tpu_custom_call.1} parent=1 // pred_check
      _
    $region39: #{tpu_custom_call.1} parent=1 // pred_check_branch
      %68 = sbr.rel (0) target = $region41
    $region40: #{tpu_custom_call.1} parent=1 // pred_region
      %69 = dma.done [#allocation7], 1280
    $region41: #{tpu_custom_call.1} parent=1 // pred_fallthru
      _
    // Predicated region
    $region42: #{tpu_custom_call.1} parent=1 // pred_check
      _
    $region43: #{tpu_custom_call.1} parent=1 // pred_check_branch
      %71 = sbr.rel (0) target = $region45
    $region44: #{tpu_custom_call.1} parent=1 // pred_region
      %72 = dma.done [#allocation7], 1024
    $region45: #{tpu_custom_call.1} parent=1 // pred_fallthru
      _
    %v74 = vld [vmem:[#allocation3] sm:$0xf]
    %v75 = vld [vmem:[#allocation3 + $0x4] sm:$0xf]
    %v76 = vld [vmem:[#allocation3 + $0x8] sm:$0xf]
    %v77 = vld [vmem:[#allocation3 + $0xc] sm:$0xf]
    %v78 = vld [vmem:[#allocation3 + $0x10] sm:$0xf]
    %v79 = vld [vmem:[#allocation3 + $0x14] sm:$0xf]
    %v80 = vld [vmem:[#allocation3 + $0x18] sm:$0xf]
    %v81 = vld [vmem:[#allocation3 + $0x1c] sm:$0xf]
    %v82 = vld [vmem:[#allocation3 + $0x20] sm:$0xf]
    %v83 = vld [vmem:[#allocation3 + $0x24] sm:$0xf]
    %v84 = vld [vmem:[#allocation3 + $0x28] sm:$0xf]
    %v85 = vld [vmem:[#allocation3 + $0x2c] sm:$0xf]
    %v86 = vld [vmem:[#allocation3 + $0x30] sm:$0xf]
    %v87 = vld [vmem:[#allocation3 + $0x34] sm:$0xf]
    %v88 = vld [vmem:[#allocation3 + $0x38] sm:$0xf]
    %v89 = vld [vmem:[#allocation3 + $0x3c] sm:$0xf]
    %v90 = vld [vmem:[#allocation3 + $0x40] sm:$0xf]
    %v91 = vld [vmem:[#allocation3 + $0x44] sm:$0xf]
    %v92 = vld [vmem:[#allocation3 + $0x48] sm:$0xf]
    %v93 = vld [vmem:[#allocation3 + $0x4c] sm:$0xf]
    %v94 = vld [vmem:[#allocation3 + $0x50] sm:$0xf]
    %v95 = vld [vmem:[#allocation3 + $0x54] sm:$0xf]
    %v96 = vld [vmem:[#allocation3 + $0x58] sm:$0xf]
    %v97 = vld [vmem:[#allocation3 + $0x5c] sm:$0xf]
    %v98 = vld [vmem:[#allocation6] sm:$0xf]
    %v99 = vld [vmem:[#allocation6 + $0x4] sm:$0xf]
    %v100 = vld [vmem:[#allocation6 + $0x8] sm:$0xf]
    %v101 = vld [vmem:[#allocation6 + $0xc] sm:$0xf]
    %vm102 = vsmask.f32 3328
    %vm103 = vsmask.f32 7440
    %vm104 = vmor %vm102, %vm103
    %v106 = vshrl.u32 %v74, 16
    %v108 = vrot.slane %v106, 4
    %v109 = vshll.u32 %v74, 16
    %v111 = vrot.slane %v109, 5
    %v112 = vor.u32 %v108, %v111
    %v113 = vrot.slane %v112, 4
    %v115 = vshll.u32 %v75, 16
    %v117 = vrot.slane %v115, 5
    %v118 = vsel %vm104, %v113, %v117
    %v119 = vshrl.u32 %v75, 16
    %v121 = vrot.slane %v119, 4
    %v122 = vor.u32 %v121, %v117
    %v123 = vrot.slane %v122, 4
    %v125 = vshll.u32 %v76, 16
    %v127 = vrot.slane %v125, 5
    %v128 = vsel %vm104, %v123, %v127
    %v130 = vshrl.u32 %v77, 16
    %v132 = vrot.slane %v130, 4
    %v133 = vshll.u32 %v77, 16
    %v135 = vrot.slane %v133, 5
    %v136 = vor.u32 %v132, %v135
    %v137 = vrot.slane %v136, 4
    %v139 = vshll.u32 %v78, 16
    %v141 = vrot.slane %v139, 5
    %v142 = vsel %vm104, %v137, %v141
    %v143 = vshrl.u32 %v78, 16
    %v145 = vrot.slane %v143, 4
    %v146 = vor.u32 %v145, %v141
    %v147 = vrot.slane %v146, 4
    %v149 = vshll.u32 %v79, 16
    %v151 = vrot.slane %v149, 5
    %v152 = vsel %vm104, %v147, %v151
    %v154 = vshrl.u32 %v80, 16
    %v156 = vrot.slane %v154, 4
    %v157 = vshll.u32 %v80, 16
    %v159 = vrot.slane %v157, 5
    %v160 = vor.u32 %v156, %v159
    %v161 = vrot.slane %v160, 4
    %v163 = vshll.u32 %v81, 16
    %v165 = vrot.slane %v163, 5
    %v166 = vsel %vm104, %v161, %v165
    %v167 = vshrl.u32 %v81, 16
    %v169 = vrot.slane %v167, 4
    %v170 = vor.u32 %v169, %v165
    %v171 = vrot.slane %v170, 4
    %v173 = vshll.u32 %v82, 16
    %v175 = vrot.slane %v173, 5
    %v176 = vsel %vm104, %v171, %v175
    %v178 = vshrl.u32 %v83, 16
    %v180 = vrot.slane %v178, 4
    %v181 = vshll.u32 %v83, 16
    %v183 = vrot.slane %v181, 5
    %v184 = vor.u32 %v180, %v183
    %v185 = vrot.slane %v184, 4
    %v187 = vshll.u32 %v84, 16
    %v189 = vrot.slane %v187, 5
    %v190 = vsel %vm104, %v185, %v189
    %v191 = vshrl.u32 %v84, 16
    %v193 = vrot.slane %v191, 4
    %v194 = vor.u32 %v193, %v189
    %v195 = vrot.slane %v194, 4
    %v197 = vshll.u32 %v85, 16
    %v199 = vrot.slane %v197, 5
    %v200 = vsel %vm104, %v195, %v199
    %v202 = vshrl.u32 %v86, 16
    %v204 = vrot.slane %v202, 4
    %v205 = vshll.u32 %v86, 16
    %v207 = vrot.slane %v205, 5
    %v208 = vor.u32 %v204, %v207
    %v209 = vrot.slane %v208, 4
    %v211 = vshll.u32 %v87, 16
    %v213 = vrot.slane %v211, 5
    %v214 = vsel %vm104, %v209, %v213
    %v215 = vshrl.u32 %v87, 16
    %v217 = vrot.slane %v215, 4
    %v218 = vor.u32 %v217, %v213
    %v219 = vrot.slane %v218, 4
    %v221 = vshll.u32 %v88, 16
    %v223 = vrot.slane %v221, 5
    %v224 = vsel %vm104, %v219, %v223
    %v226 = vshrl.u32 %v89, 16
    %v228 = vrot.slane %v226, 4
    %v229 = vshll.u32 %v89, 16
    %v231 = vrot.slane %v229, 5
    %v232 = vor.u32 %v228, %v231
    %v233 = vrot.slane %v232, 4
    %v235 = vshll.u32 %v90, 16
    %v237 = vrot.slane %v235, 5
    %v238 = vsel %vm104, %v233, %v237
    %v239 = vshrl.u32 %v90, 16
    %v241 = vrot.slane %v239, 4
    %v242 = vor.u32 %v241, %v237
    %v243 = vrot.slane %v242, 4
    %v245 = vshll.u32 %v91, 16
    %v247 = vrot.slane %v245, 5
    %v248 = vsel %vm104, %v243, %v247
    %v250 = vshrl.u32 %v92, 16
    %v252 = vrot.slane %v250, 4
    %v253 = vshll.u32 %v92, 16
    %v255 = vrot.slane %v253, 5
    %v256 = vor.u32 %v252, %v255
    %v257 = vrot.slane %v256, 4
    %v259 = vshll.u32 %v93, 16
    %v261 = vrot.slane %v259, 5
    %v262 = vsel %vm104, %v257, %v261
    %v263 = vshrl.u32 %v93, 16
    %v265 = vrot.slane %v263, 4
    %v266 = vor.u32 %v265, %v261
    %v267 = vrot.slane %v266, 4
    %v269 = vshll.u32 %v94, 16
    %v271 = vrot.slane %v269, 5
    %v272 = vsel %vm104, %v267, %v271
    %v274 = vshrl.u32 %v95, 16
    %v276 = vrot.slane %v274, 4
    %v277 = vshll.u32 %v95, 16
    %v279 = vrot.slane %v277, 5
    %v280 = vor.u32 %v276, %v279
    %v281 = vrot.slane %v280, 4
    %v283 = vshll.u32 %v96, 16
    %v285 = vrot.slane %v283, 5
    %v286 = vsel %vm104, %v281, %v285
    %v287 = vshrl.u32 %v96, 16
    %v289 = vrot.slane %v287, 4
    %v290 = vor.u32 %v289, %v285
    %v291 = vrot.slane %v290, 4
    %v293 = vshll.u32 %v97, 16
    %v295 = vrot.slane %v293, 5
    %v296 = vsel %vm104, %v291, %v295
    %s297 = scalar_lea.vmem [#allocation6], 16
    %v298 = vld [vmem:[%s297] sm:$0xf]
    %v299 = vld [vmem:[%s297 + $0x4] sm:$0xf]
    %v300 = vld [vmem:[%s297 + $0x8] sm:$0xf]
    %v301 = vld [vmem:[%s297 + $0xc] sm:$0xf]
    %v302 = vunpack.c.l.b16 %v118
    %v303 = vunpack.c.l.b16 %v128
    %v304 = vunpack.c.l.b16 %v142
    %v305 = vunpack.c.l.b16 %v152
    %v306 = vunpack.c.l.b16 %v166
    %v307 = vunpack.c.l.b16 %v176
    %v308 = vunpack.c.l.b16 %v190
    %v309 = vunpack.c.l.b16 %v200
    %v310 = vunpack.c.l.b16 %v214
    %v311 = vunpack.c.l.b16 %v224
    %v312 = vunpack.c.l.b16 %v238
    %v313 = vunpack.c.l.b16 %v248
    %v314 = vunpack.c.l.b16 %v262
    %v315 = vunpack.c.l.b16 %v272
    %v316 = vunpack.c.l.b16 %v286
    %v317 = vunpack.c.l.b16 %v296
    %v318 = vpack.c.b16 %v303, %v302
    %v319 = vpack.c.b16 %v305, %v304
    %v320 = vpack.c.b16 %v307, %v306
    %v321 = vpack.c.b16 %v309, %v308
    %v322 = vpack.c.b16 %v311, %v310
    %v323 = vpack.c.b16 %v313, %v312
    %v324 = vpack.c.b16 %v315, %v314
    %v325 = vpack.c.b16 %v317, %v316
    %v330 = vunpack.c.l.b16 %v298
    %v331 = vunpack.c.l.b16 %v299
    %v332 = vunpack.c.l.b16 %v300
    %v333 = vunpack.c.l.b16 %v301
    %v334 = vpack.c.b16 %v331, %v330
    %v335 = vpack.c.b16 %v333, %v332
    %vm338 = vcmask 261120
    %v340 = vsel %vm338, %v318, 0
    %v343 = vsel %vm338, %v319, 0
    %v346 = vsel %vm338, %v320, 0
    %v349 = vsel %vm338, %v321, 0
    %v352 = vsel %vm338, %v322, 0
    %v355 = vsel %vm338, %v323, 0
    %v358 = vsel %vm338, %v324, 0
    %v361 = vsel %vm338, %v325, 0
    %363 = vmatprep.subr.bf16.mxu0 0
    %364 = vmatpush1.bf16.msra.mxu0 %v334
    %365 = vmatprep.subr.bf16.mxu0 0
    %366 = vmatpush1.bf16.msra.mxu0 %v335
    %367 = vmatprep.subr.bf16.mxu0 0
    %368 = vmatpush1.bf16.msra.mxu0 0
    %369 = vmatprep.subr.bf16.mxu0 0
    %370 = vmatpush1.bf16.msra.mxu0 0
    %371 = vmatprep.subr.bf16.mxu0 0
    %372 = vmatpush1.bf16.msra.mxu0 0
    %373 = vmatprep.subr.bf16.mxu0 0
    %374 = vmatpush1.bf16.msra.mxu0 0
    %375 = vmatprep.subr.bf16.mxu0 0
    %376 = vmatpush1.bf16.msra.mxu0 0
    %377 = vmatprep.subr.bf16.mxu0 0
    %378 = vmatpush1.bf16.msra.mxu0 0
    %379 = vmatprep.subr.bf16.mxu0 0
    %380 = vmatpush1.bf16.msra.mxu0 0
    %381 = vmatprep.subr.bf16.mxu0 0
    %382 = vmatpush1.bf16.msra.mxu0 0
    %383 = vmatprep.subr.bf16.mxu0 0
    %384 = vmatpush1.bf16.msra.mxu0 0
    %385 = vmatprep.subr.bf16.mxu0 0
    %386 = vmatpush1.bf16.msra.mxu0 0
    %387 = vmatprep.subr.bf16.mxu0 0
    %388 = vmatpush1.bf16.msra.mxu0 0
    %389 = vmatprep.subr.bf16.mxu0 0
    %390 = vmatpush1.bf16.msra.mxu0 0
    %391 = vmatprep.subr.bf16.mxu0 0
    %392 = vmatpush1.bf16.msra.mxu0 0
    %393 = vmatprep.subr.bf16.mxu0 0
    %394 = vmatpush1.bf16.msra.mxu0 0
    %395 = vmatprep.mubr.bf16.mxu0 0
    %396 = vmatmul.mubr.bf16.gmra.mrb[0].mxu0 %v340
    %v397 = vpop.f32.mrb[0].mxu0
    %v398 = vadd.f32 0.0, %v397
    %v399 = vpop.f32.mrb[0].mxu0
    %v400 = vpop.f32.mrb[0].mxu0
    %v401 = vadd.f32 0.0, %v400
    %v402 = vpop.f32.mrb[0].mxu0
    %403 = vmatprep.mubr.bf16.mxu0 0
    %404 = vmatmul.mubr.bf16.gmra.mrb[0].mxu0 %v343
    %v405 = vpop.f32.mrb[0].mxu0
    %v406 = vadd.f32 0.0, %v405
    %v407 = vpop.f32.mrb[0].mxu0
    %v408 = vpop.f32.mrb[0].mxu0
    %v409 = vadd.f32 0.0, %v408
    %v410 = vpop.f32.mrb[0].mxu0
    %411 = vmatprep.mubr.bf16.mxu0 0
    %412 = vmatmul.mubr.bf16.gmra.mrb[0].mxu0 %v346
    %v413 = vpop.f32.mrb[0].mxu0
    %v414 = vadd.f32 0.0, %v413
    %v415 = vpop.f32.mrb[0].mxu0
    %v416 = vpop.f32.mrb[0].mxu0
    %v417 = vadd.f32 0.0, %v416
    %v418 = vpop.f32.mrb[0].mxu0
    %419 = vmatprep.mubr.bf16.mxu0 0
    %420 = vmatmul.mubr.bf16.gmra.mrb[0].mxu0 %v349
    %v421 = vpop.f32.mrb[0].mxu0
    %v422 = vadd.f32 0.0, %v421
    %v423 = vpop.f32.mrb[0].mxu0
    %v424 = vpop.f32.mrb[0].mxu0
    %v425 = vadd.f32 0.0, %v424
    %v426 = vpop.f32.mrb[0].mxu0
    %427 = vmatprep.mubr.bf16.mxu0 0
    %428 = vmatmul.mubr.bf16.gmra.mrb[0].mxu0 %v352
    %v429 = vpop.f32.mrb[0].mxu0
    %v430 = vadd.f32 0.0, %v429
    %v431 = vpop.f32.mrb[0].mxu0
    %v432 = vpop.f32.mrb[0].mxu0
    %v433 = vadd.f32 0.0, %v432
    %v434 = vpop.f32.mrb[0].mxu0
    %435 = vmatprep.mubr.bf16.mxu0 0
    %436 = vmatmul.mubr.bf16.gmra.mrb[0].mxu0 %v355
    %v437 = vpop.f32.mrb[0].mxu0
    %v438 = vadd.f32 0.0, %v437
    %v439 = vpop.f32.mrb[0].mxu0
    %v440 = vpop.f32.mrb[0].mxu0
    %v441 = vadd.f32 0.0, %v440
    %v442 = vpop.f32.mrb[0].mxu0
    %443 = vmatprep.mubr.bf16.mxu0 0
    %444 = vmatmul.mubr.bf16.gmra.mrb[0].mxu0 %v358
    %v445 = vpop.f32.mrb[0].mxu0
    %v446 = vadd.f32 0.0, %v445
    %v447 = vpop.f32.mrb[0].mxu0
    %v448 = vpop.f32.mrb[0].mxu0
    %v449 = vadd.f32 0.0, %v448
    %v450 = vpop.f32.mrb[0].mxu0
    %451 = vmatprep.mubr.bf16.mxu0 0
    %452 = vmatmul.mubr.bf16.gmra.mrb[0].mxu0 %v361
    %v453 = vpop.f32.mrb[0].mxu0
    %v454 = vadd.f32 0.0, %v453
    %v455 = vpop.f32.mrb[0].mxu0
    %v456 = vpop.f32.mrb[0].mxu0
    %v457 = vadd.f32 0.0, %v456
    %v458 = vpop.f32.mrb[0].mxu0
    %459 = vdwg.mxu0
    %v476 = vunpack.c.l.b16 %v74
    %v477 = vunpack.c.l.b16 %v75
    %v478 = vunpack.c.l.b16 %v77
    %v479 = vunpack.c.l.b16 %v78
    %v480 = vunpack.c.l.b16 %v80
    %v481 = vunpack.c.l.b16 %v81
    %v482 = vunpack.c.l.b16 %v83
    %v483 = vunpack.c.l.b16 %v84
    %v484 = vunpack.c.l.b16 %v86
    %v485 = vunpack.c.l.b16 %v87
    %v486 = vunpack.c.l.b16 %v89
    %v487 = vunpack.c.l.b16 %v90
    %v488 = vunpack.c.l.b16 %v92
    %v489 = vunpack.c.l.b16 %v93
    %v490 = vunpack.c.l.b16 %v95
    %v491 = vunpack.c.l.b16 %v96
    %v492 = vpack.c.b16 %v477, %v476
    %v493 = vpack.c.b16 %v479, %v478
    %v494 = vpack.c.b16 %v481, %v480
    %v495 = vpack.c.b16 %v483, %v482
    %v496 = vpack.c.b16 %v485, %v484
    %v497 = vpack.c.b16 %v487, %v486
    %v498 = vpack.c.b16 %v489, %v488
    %v499 = vpack.c.b16 %v491, %v490
    %v504 = vunpack.c.l.b16 %v98
    %v505 = vunpack.c.l.b16 %v99
    %v506 = vunpack.c.l.b16 %v100
    %v507 = vunpack.c.l.b16 %v101
    %v508 = vpack.c.b16 %v505, %v504
    %v509 = vpack.c.b16 %v507, %v506
    %v513 = vsel %vm338, %v492, 0
    %v516 = vsel %vm338, %v493, 0
    %v519 = vsel %vm338, %v494, 0
    %v522 = vsel %vm338, %v495, 0
    %v525 = vsel %vm338, %v496, 0
    %v528 = vsel %vm338, %v497, 0
    %v531 = vsel %vm338, %v498, 0
    %v534 = vsel %vm338, %v499, 0
    %536 = vmatprep.subr.bf16.mxu0 0
    %537 = vmatpush1.bf16.msra.mxu0 %v508
    %538 = vmatprep.subr.bf16.mxu0 0
    %539 = vmatpush1.bf16.msra.mxu0 %v509
    %540 = vmatprep.subr.bf16.mxu0 0
    %541 = vmatpush1.bf16.msra.mxu0 0
    %542 = vmatprep.subr.bf16.mxu0 0
    %543 = vmatpush1.bf16.msra.mxu0 0
    %544 = vmatprep.subr.bf16.mxu0 0
    %545 = vmatpush1.bf16.msra.mxu0 0
    %546 = vmatprep.subr.bf16.mxu0 0
    %547 = vmatpush1.bf16.msra.mxu0 0
    %548 = vmatprep.subr.bf16.mxu0 0
    %549 = vmatpush1.bf16.msra.mxu0 0
    %550 = vmatprep.subr.bf16.mxu0 0
    %551 = vmatpush1.bf16.msra.mxu0 0
    %552 = vmatprep.subr.bf16.mxu0 0
    %553 = vmatpush1.bf16.msra.mxu0 0
    %554 = vmatprep.subr.bf16.mxu0 0
    %555 = vmatpush1.bf16.msra.mxu0 0
    %556 = vmatprep.subr.bf16.mxu0 0
    %557 = vmatpush1.bf16.msra.mxu0 0
    %558 = vmatprep.subr.bf16.mxu0 0
    %559 = vmatpush1.bf16.msra.mxu0 0
    %560 = vmatprep.subr.bf16.mxu0 0
    %561 = vmatpush1.bf16.msra.mxu0 0
    %562 = vmatprep.subr.bf16.mxu0 0
    %563 = vmatpush1.bf16.msra.mxu0 0
    %564 = vmatprep.subr.bf16.mxu0 0
    %565 = vmatpush1.bf16.msra.mxu0 0
    %566 = vmatprep.subr.bf16.mxu0 0
    %567 = vmatpush1.bf16.msra.mxu0 0
    %568 = vmatprep.mubr.bf16.mxu0 0
    %569 = vmatmul.mubr.bf16.gmra.mrb[0].mxu0 %v513
    %v570 = vpop.f32.mrb[0].mxu0
    %v571 = vadd.f32 %v398, %v570
    %v572 = vpop.f32.mrb[0].mxu0
    %v573 = vpop.f32.mrb[0].mxu0
    %v574 = vadd.f32 %v401, %v573
    %v575 = vpop.f32.mrb[0].mxu0
    %576 = vmatprep.mubr.bf16.mxu0 0
    %577 = vmatmul.mubr.bf16.gmra.mrb[0].mxu0 %v516
    %v578 = vpop.f32.mrb[0].mxu0
    %v579 = vadd.f32 %v406, %v578
    %v580 = vpop.f32.mrb[0].mxu0
    %v581 = vpop.f32.mrb[0].mxu0
    %v582 = vadd.f32 %v409, %v581
    %v583 = vpop.f32.mrb[0].mxu0
    %584 = vmatprep.mubr.bf16.mxu0 0
    %585 = vmatmul.mubr.bf16.gmra.mrb[0].mxu0 %v519
    %v586 = vpop.f32.mrb[0].mxu0
    %v587 = vadd.f32 %v414, %v586
    %v588 = vpop.f32.mrb[0].mxu0
    %v589 = vpop.f32.mrb[0].mxu0
    %v590 = vadd.f32 %v417, %v589
    %v591 = vpop.f32.mrb[0].mxu0
    %592 = vmatprep.mubr.bf16.mxu0 0
    %593 = vmatmul.mubr.bf16.gmra.mrb[0].mxu0 %v522
    %v594 = vpop.f32.mrb[0].mxu0
    %v595 = vadd.f32 %v422, %v594
    %v596 = vpop.f32.mrb[0].mxu0
    %v597 = vpop.f32.mrb[0].mxu0
    %v598 = vadd.f32 %v425, %v597
    %v599 = vpop.f32.mrb[0].mxu0
    %600 = vmatprep.mubr.bf16.mxu0 0
    %601 = vmatmul.mubr.bf16.gmra.mrb[0].mxu0 %v525
    %v602 = vpop.f32.mrb[0].mxu0
    %v603 = vadd.f32 %v430, %v602
    %v604 = vpop.f32.mrb[0].mxu0
    %v605 = vpop.f32.mrb[0].mxu0
    %v606 = vadd.f32 %v433, %v605
    %v607 = vpop.f32.mrb[0].mxu0
    %608 = vmatprep.mubr.bf16.mxu0 0
    %609 = vmatmul.mubr.bf16.gmra.mrb[0].mxu0 %v528
    %v610 = vpop.f32.mrb[0].mxu0
    %v611 = vadd.f32 %v438, %v610
    %v612 = vpop.f32.mrb[0].mxu0
    %v613 = vpop.f32.mrb[0].mxu0
    %v614 = vadd.f32 %v441, %v613
    %v615 = vpop.f32.mrb[0].mxu0
    %616 = vmatprep.mubr.bf16.mxu0 0
    %617 = vmatmul.mubr.bf16.gmra.mrb[0].mxu0 %v531
    %v618 = vpop.f32.mrb[0].mxu0
    %v619 = vadd.f32 %v446, %v618
    %v620 = vpop.f32.mrb[0].mxu0
    %v621 = vpop.f32.mrb[0].mxu0
    %v622 = vadd.f32 %v449, %v621
    %v623 = vpop.f32.mrb[0].mxu0
    %624 = vmatprep.mubr.bf16.mxu0 0
    %625 = vmatmul.mubr.bf16.gmra.mrb[0].mxu0 %v534
    %v626 = vpop.f32.mrb[0].mxu0
    %v627 = vadd.f32 %v454, %v626
    %v628 = vpop.f32.mrb[0].mxu0
    %v629 = vpop.f32.mrb[0].mxu0
    %v630 = vadd.f32 %v457, %v629
    %v631 = vpop.f32.mrb[0].mxu0
    %632 = vdwg.mxu0
    %vm641 = vcmask 1042432
    %vm642 = vcmask 1046532
    %vm643 = vmor %vm641, %vm642
    %v644 = vrot.slane %v74, 5
    %v645 = vrot.slane %v644, 4
    %v646 = vrot.slane %v75, 5
    %v647 = vsel %vm643, %v645, %v646
    %v648 = vrot.slane %v646, 4
    %v649 = vrot.slane %v76, 5
    %v650 = vsel %vm643, %v648, %v649
    %v651 = vrot.slane %v77, 5
    %v652 = vrot.slane %v651, 4
    %v653 = vrot.slane %v78, 5
    %v654 = vsel %vm643, %v652, %v653
    %v655 = vrot.slane %v653, 4
    %v656 = vrot.slane %v79, 5
    %v657 = vsel %vm643, %v655, %v656
    %v658 = vrot.slane %v80, 5
    %v659 = vrot.slane %v658, 4
    %v660 = vrot.slane %v81, 5
    %v661 = vsel %vm643, %v659, %v660
    %v662 = vrot.slane %v660, 4
    %v663 = vrot.slane %v82, 5
    %v664 = vsel %vm643, %v662, %v663
    %v665 = vrot.slane %v83, 5
    %v666 = vrot.slane %v665, 4
    %v667 = vrot.slane %v84, 5
    %v668 = vsel %vm643, %v666, %v667
    %v669 = vrot.slane %v667, 4
    %v670 = vrot.slane %v85, 5
    %v671 = vsel %vm643, %v669, %v670
    %v672 = vrot.slane %v86, 5
    %v673 = vrot.slane %v672, 4
    %v674 = vrot.slane %v87, 5
    %v675 = vsel %vm643, %v673, %v674
    %v676 = vrot.slane %v674, 4
    %v677 = vrot.slane %v88, 5
    %v678 = vsel %vm643, %v676, %v677
    %v679 = vrot.slane %v89, 5
    %v680 = vrot.slane %v679, 4
    %v681 = vrot.slane %v90, 5
    %v682 = vsel %vm643, %v680, %v681
    %v683 = vrot.slane %v681, 4
    %v684 = vrot.slane %v91, 5
    %v685 = vsel %vm643, %v683, %v684
    %v686 = vrot.slane %v92, 5
    %v687 = vrot.slane %v686, 4
    %v688 = vrot.slane %v93, 5
    %v689 = vsel %vm643, %v687, %v688
    %v690 = vrot.slane %v688, 4
    %v691 = vrot.slane %v94, 5
    %v692 = vsel %vm643, %v690, %v691
    %v693 = vrot.slane %v95, 5
    %v694 = vrot.slane %v693, 4
    %v695 = vrot.slane %v96, 5
    %v696 = vsel %vm643, %v694, %v695
    %v697 = vrot.slane %v695, 4
    %v698 = vrot.slane %v97, 5
    %v699 = vsel %vm643, %v697, %v698
    %s700 = scalar_lea.vmem [#allocation6], 32
    %v701 = vld [vmem:[%s700] sm:$0xf]
    %v702 = vld [vmem:[%s700 + $0x4] sm:$0xf]
    %v703 = vld [vmem:[%s700 + $0x8] sm:$0xf]
    %v704 = vld [vmem:[%s700 + $0xc] sm:$0xf]
    %v705 = vunpack.c.l.b16 %v647
    %v706 = vunpack.c.l.b16 %v650
    %v707 = vunpack.c.l.b16 %v654
    %v708 = vunpack.c.l.b16 %v657
    %v709 = vunpack.c.l.b16 %v661
    %v710 = vunpack.c.l.b16 %v664
    %v711 = vunpack.c.l.b16 %v668
    %v712 = vunpack.c.l.b16 %v671
    %v713 = vunpack.c.l.b16 %v675
    %v714 = vunpack.c.l.b16 %v678
    %v715 = vunpack.c.l.b16 %v682
    %v716 = vunpack.c.l.b16 %v685
    %v717 = vunpack.c.l.b16 %v689
    %v718 = vunpack.c.l.b16 %v692
    %v719 = vunpack.c.l.b16 %v696
    %v720 = vunpack.c.l.b16 %v699
    %v721 = vpack.c.b16 %v706, %v705
    %v722 = vpack.c.b16 %v708, %v707
    %v723 = vpack.c.b16 %v710, %v709
    %v724 = vpack.c.b16 %v712, %v711
    %v725 = vpack.c.b16 %v714, %v713
    %v726 = vpack.c.b16 %v716, %v715
    %v727 = vpack.c.b16 %v718, %v717
    %v728 = vpack.c.b16 %v720, %v719
    %v733 = vunpack.c.l.b16 %v701
    %v734 = vunpack.c.l.b16 %v702
    %v735 = vunpack.c.l.b16 %v703
    %v736 = vunpack.c.l.b16 %v704
    %v737 = vpack.c.b16 %v734, %v733
    %v738 = vpack.c.b16 %v736, %v735
    %v742 = vsel %vm338, %v721, 0
    %v745 = vsel %vm338, %v722, 0
    %v748 = vsel %vm338, %v723, 0
    %v751 = vsel %vm338, %v724, 0
    %v754 = vsel %vm338, %v725, 0
    %v757 = vsel %vm338, %v726, 0
    %v760 = vsel %vm338, %v727, 0
    %v763 = vsel %vm338, %v728, 0
    %765 = vmatprep.subr.bf16.mxu0 0
    %766 = vmatpush1.bf16.msra.mxu0 %v737
    %767 = vmatprep.subr.bf16.mxu0 0
    %768 = vmatpush1.bf16.msra.mxu0 %v738
    %769 = vmatprep.subr.bf16.mxu0 0
    %770 = vmatpush1.bf16.msra.mxu0 0
    %771 = vmatprep.subr.bf16.mxu0 0
    %772 = vmatpush1.bf16.msra.mxu0 0
    %773 = vmatprep.subr.bf16.mxu0 0
    %774 = vmatpush1.bf16.msra.mxu0 0
    %775 = vmatprep.subr.bf16.mxu0 0
    %776 = vmatpush1.bf16.msra.mxu0 0
    %777 = vmatprep.subr.bf16.mxu0 0
    %778 = vmatpush1.bf16.msra.mxu0 0
    %779 = vmatprep.subr.bf16.mxu0 0
    %780 = vmatpush1.bf16.msra.mxu0 0
    %781 = vmatprep.subr.bf16.mxu0 0
    %782 = vmatpush1.bf16.msra.mxu0 0
    %783 = vmatprep.subr.bf16.mxu0 0
    %784 = vmatpush1.bf16.msra.mxu0 0
    %785 = vmatprep.subr.bf16.mxu0 0
    %786 = vmatpush1.bf16.msra.mxu0 0
    %787 = vmatprep.subr.bf16.mxu0 0
    %788 = vmatpush1.bf16.msra.mxu0 0
    %789 = vmatprep.subr.bf16.mxu0 0
    %790 = vmatpush1.bf16.msra.mxu0 0
    %791 = vmatprep.subr.bf16.mxu0 0
    %792 = vmatpush1.bf16.msra.mxu0 0
    %793 = vmatprep.subr.bf16.mxu0 0
    %794 = vmatpush1.bf16.msra.mxu0 0
    %795 = vmatprep.subr.bf16.mxu0 0
    %796 = vmatpush1.bf16.msra.mxu0 0
    %797 = vmatprep.mubr.bf16.mxu0 0
    %798 = vmatmul.mubr.bf16.gmra.mrb[0].mxu0 %v742
    %v799 = vpop.f32.mrb[0].mxu0
    %v800 = vadd.f32 0.0, %v799
    %v801 = vpop.f32.mrb[0].mxu0
    %v802 = vpop.f32.mrb[0].mxu0
    %v803 = vadd.f32 0.0, %v802
    %v804 = vpop.f32.mrb[0].mxu0
    %805 = vmatprep.mubr.bf16.mxu0 0
    %806 = vmatmul.mubr.bf16.gmra.mrb[0].mxu0 %v745
    %v807 = vpop.f32.mrb[0].mxu0
    %v808 = vadd.f32 0.0, %v807
    %v809 = vpop.f32.mrb[0].mxu0
    %v810 = vpop.f32.mrb[0].mxu0
    %v811 = vadd.f32 0.0, %v810
    %v812 = vpop.f32.mrb[0].mxu0
    %813 = vmatprep.mubr.bf16.mxu0 0
    %814 = vmatmul.mubr.bf16.gmra.mrb[0].mxu0 %v748
    %v815 = vpop.f32.mrb[0].mxu0
    %v816 = vadd.f32 0.0, %v815
    %v817 = vpop.f32.mrb[0].mxu0
    %v818 = vpop.f32.mrb[0].mxu0
    %v819 = vadd.f32 0.0, %v818
    %v820 = vpop.f32.mrb[0].mxu0
    %821 = vmatprep.mubr.bf16.mxu0 0
    %822 = vmatmul.mubr.bf16.gmra.mrb[0].mxu0 %v751
    %v823 = vpop.f32.mrb[0].mxu0
    %v824 = vadd.f32 0.0, %v823
    %v825 = vpop.f32.mrb[0].mxu0
    %v826 = vpop.f32.mrb[0].mxu0
    %v827 = vadd.f32 0.0, %v826
    %v828 = vpop.f32.mrb[0].mxu0
    %829 = vmatprep.mubr.bf16.mxu0 0
    %830 = vmatmul.mubr.bf16.gmra.mrb[0].mxu0 %v754
    %v831 = vpop.f32.mrb[0].mxu0
    %v832 = vadd.f32 0.0, %v831
    %v833 = vpop.f32.mrb[0].mxu0
    %v834 = vpop.f32.mrb[0].mxu0
    %v835 = vadd.f32 0.0, %v834
    %v836 = vpop.f32.mrb[0].mxu0
    %837 = vmatprep.mubr.bf16.mxu0 0
    %838 = vmatmul.mubr.bf16.gmra.mrb[0].mxu0 %v757
    %v839 = vpop.f32.mrb[0].mxu0
    %v840 = vadd.f32 0.0, %v839
    %v841 = vpop.f32.mrb[0].mxu0
    %v842 = vpop.f32.mrb[0].mxu0
    %v843 = vadd.f32 0.0, %v842
    %v844 = vpop.f32.mrb[0].mxu0
    %845 = vmatprep.mubr.bf16.mxu0 0
    %846 = vmatmul.mubr.bf16.gmra.mrb[0].mxu0 %v760
    %v847 = vpop.f32.mrb[0].mxu0
    %v848 = vadd.f32 0.0, %v847
    %v849 = vpop.f32.mrb[0].mxu0
    %v850 = vpop.f32.mrb[0].mxu0
    %v851 = vadd.f32 0.0, %v850
    %v852 = vpop.f32.mrb[0].mxu0
    %853 = vmatprep.mubr.bf16.mxu0 0
    %854 = vmatmul.mubr.bf16.gmra.mrb[0].mxu0 %v763
    %v855 = vpop.f32.mrb[0].mxu0
    %v856 = vadd.f32 0.0, %v855
    %v857 = vpop.f32.mrb[0].mxu0
    %v858 = vpop.f32.mrb[0].mxu0
    %v859 = vadd.f32 0.0, %v858
    %v860 = vpop.f32.mrb[0].mxu0
    %861 = vdwg.mxu0
    %v862 = vadd.f32 %v571, %v800
    %v863 = vadd.f32 %v574, %v803
    %v864 = vadd.f32 %v579, %v808
    %v865 = vadd.f32 %v582, %v811
    %v866 = vadd.f32 %v587, %v816
    %v867 = vadd.f32 %v590, %v819
    %v868 = vadd.f32 %v595, %v824
    %v869 = vadd.f32 %v598, %v827
    %v870 = vadd.f32 %v603, %v832
    %v871 = vadd.f32 %v606, %v835
    %v872 = vadd.f32 %v611, %v840
    %v873 = vadd.f32 %v614, %v843
    %v874 = vadd.f32 %v619, %v848
    %v875 = vadd.f32 %v622, %v851
    %v876 = vadd.f32 %v627, %v856
    %v877 = vadd.f32 %v630, %v859
    %vm878 = vsmask.f32 2304
    %vm879 = vsmask.f32 6416
    %vm880 = vmor %vm878, %vm879
    %v881 = vrot.slane %v106, 5
    %v882 = vrot.slane %v109, 6
    %v883 = vor.u32 %v881, %v882
    %v884 = vrot.slane %v883, 4
    %v885 = vrot.slane %v119, 5
    %v886 = vrot.slane %v115, 6
    %v887 = vor.u32 %v885, %v886
    %v888 = vsel %vm880, %v884, %v887
    %v889 = vrot.slane %v887, 4
    %v890 = vshrl.u32 %v76, 16
    %v892 = vrot.slane %v890, 5
    %v893 = vrot.slane %v125, 6
    %v894 = vor.u32 %v892, %v893
    %v895 = vsel %vm880, %v889, %v894
    %v896 = vrot.slane %v130, 5
    %v897 = vrot.slane %v133, 6
    %v898 = vor.u32 %v896, %v897
    %v899 = vrot.slane %v898, 4
    %v900 = vrot.slane %v143, 5
    %v901 = vrot.slane %v139, 6
    %v902 = vor.u32 %v900, %v901
    %v903 = vsel %vm880, %v899, %v902
    %v904 = vrot.slane %v902, 4
    %v905 = vshrl.u32 %v79, 16
    %v907 = vrot.slane %v905, 5
    %v908 = vrot.slane %v149, 6
    %v909 = vor.u32 %v907, %v908
    %v910 = vsel %vm880, %v904, %v909
    %v911 = vrot.slane %v154, 5
    %v912 = vrot.slane %v157, 6
    %v913 = vor.u32 %v911, %v912
    %v914 = vrot.slane %v913, 4
    %v915 = vrot.slane %v167, 5
    %v916 = vrot.slane %v163, 6
    %v917 = vor.u32 %v915, %v916
    %v918 = vsel %vm880, %v914, %v917
    %v919 = vrot.slane %v917, 4
    %v920 = vshrl.u32 %v82, 16
    %v922 = vrot.slane %v920, 5
    %v923 = vrot.slane %v173, 6
    %v924 = vor.u32 %v922, %v923
    %v925 = vsel %vm880, %v919, %v924
    %v926 = vrot.slane %v178, 5
    %v927 = vrot.slane %v181, 6
    %v928 = vor.u32 %v926, %v927
    %v929 = vrot.slane %v928, 4
    %v930 = vrot.slane %v191, 5
    %v931 = vrot.slane %v187, 6
    %v932 = vor.u32 %v930, %v931
    %v933 = vsel %vm880, %v929, %v932
    %v934 = vrot.slane %v932, 4
    %v935 = vshrl.u32 %v85, 16
    %v937 = vrot.slane %v935, 5
    %v938 = vrot.slane %v197, 6
    %v939 = vor.u32 %v937, %v938
    %v940 = vsel %vm880, %v934, %v939
    %v941 = vrot.slane %v202, 5
    %v942 = vrot.slane %v205, 6
    %v943 = vor.u32 %v941, %v942
    %v944 = vrot.slane %v943, 4
    %v945 = vrot.slane %v215, 5
    %v946 = vrot.slane %v211, 6
    %v947 = vor.u32 %v945, %v946
    %v948 = vsel %vm880, %v944, %v947
    %v949 = vrot.slane %v947, 4
    %v950 = vshrl.u32 %v88, 16
    %v952 = vrot.slane %v950, 5
    %v953 = vrot.slane %v221, 6
    %v954 = vor.u32 %v952, %v953
    %v955 = vsel %vm880, %v949, %v954
    %v956 = vrot.slane %v226, 5
    %v957 = vrot.slane %v229, 6
    %v958 = vor.u32 %v956, %v957
    %v959 = vrot.slane %v958, 4
    %v960 = vrot.slane %v239, 5
    %v961 = vrot.slane %v235, 6
    %v962 = vor.u32 %v960, %v961
    %v963 = vsel %vm880, %v959, %v962
    %v964 = vrot.slane %v962, 4
    %v965 = vshrl.u32 %v91, 16
    %v967 = vrot.slane %v965, 5
    %v968 = vrot.slane %v245, 6
    %v969 = vor.u32 %v967, %v968
    %v970 = vsel %vm880, %v964, %v969
    %v971 = vrot.slane %v250, 5
    %v972 = vrot.slane %v253, 6
    %v973 = vor.u32 %v971, %v972
    %v974 = vrot.slane %v973, 4
    %v975 = vrot.slane %v263, 5
    %v976 = vrot.slane %v259, 6
    %v977 = vor.u32 %v975, %v976
    %v978 = vsel %vm880, %v974, %v977
    %v979 = vrot.slane %v977, 4
    %v980 = vshrl.u32 %v94, 16
    %v982 = vrot.slane %v980, 5
    %v983 = vrot.slane %v269, 6
    %v984 = vor.u32 %v982, %v983
    %v985 = vsel %vm880, %v979, %v984
    %v986 = vrot.slane %v274, 5
    %v987 = vrot.slane %v277, 6
    %v988 = vor.u32 %v986, %v987
    %v989 = vrot.slane %v988, 4
    %v990 = vrot.slane %v287, 5
    %v991 = vrot.slane %v283, 6
    %v992 = vor.u32 %v990, %v991
    %v993 = vsel %vm880, %v989, %v992
    %v994 = vrot.slane %v992, 4
    %v995 = vshrl.u32 %v97, 16
    %v997 = vrot.slane %v995, 5
    %v998 = vrot.slane %v293, 6
    %v999 = vor.u32 %v997, %v998
    %v1000 = vsel %vm880, %v994, %v999
    %s1001 = scalar_lea.vmem [#allocation6], 48
    %v1002 = vld [vmem:[%s1001] sm:$0xf]
    %v1003 = vld [vmem:[%s1001 + $0x4] sm:$0xf]
    %v1004 = vld [vmem:[%s1001 + $0x8] sm:$0xf]
    %v1005 = vld [vmem:[%s1001 + $0xc] sm:$0xf]
    %v1006 = vunpack.c.l.b16 %v888
    %v1007 = vunpack.c.l.b16 %v895
    %v1008 = vunpack.c.l.b16 %v903
    %v1009 = vunpack.c.l.b16 %v910
    %v1010 = vunpack.c.l.b16 %v918
    %v1011 = vunpack.c.l.b16 %v925
    %v1012 = vunpack.c.l.b16 %v933
    %v1013 = vunpack.c.l.b16 %v940
    %v1014 = vunpack.c.l.b16 %v948
    %v1015 = vunpack.c.l.b16 %v955
    %v1016 = vunpack.c.l.b16 %v963
    %v1017 = vunpack.c.l.b16 %v970
    %v1018 = vunpack.c.l.b16 %v978
    %v1019 = vunpack.c.l.b16 %v985
    %v1020 = vunpack.c.l.b16 %v993
    %v1021 = vunpack.c.l.b16 %v1000
    %v1022 = vpack.c.b16 %v1007, %v1006
    %v1023 = vpack.c.b16 %v1009, %v1008
    %v1024 = vpack.c.b16 %v1011, %v1010
    %v1025 = vpack.c.b16 %v1013, %v1012
    %v1026 = vpack.c.b16 %v1015, %v1014
    %v1027 = vpack.c.b16 %v1017, %v1016
    %v1028 = vpack.c.b16 %v1019, %v1018
    %v1029 = vpack.c.b16 %v1021, %v1020
    %v1034 = vunpack.c.l.b16 %v1002
    %v1035 = vunpack.c.l.b16 %v1003
    %v1036 = vunpack.c.l.b16 %v1004
    %v1037 = vunpack.c.l.b16 %v1005
    %v1038 = vpack.c.b16 %v1035, %v1034
    %v1039 = vpack.c.b16 %v1037, %v1036
    %v1043 = vsel %vm338, %v1022, 0
    %v1046 = vsel %vm338, %v1023, 0
    %v1049 = vsel %vm338, %v1024, 0
    %v1052 = vsel %vm338, %v1025, 0
    %v1055 = vsel %vm338, %v1026, 0
    %v1058 = vsel %vm338, %v1027, 0
    %v1061 = vsel %vm338, %v1028, 0
    %v1064 = vsel %vm338, %v1029, 0
    %1066 = vmatprep.subr.bf16.mxu0 0
    %1067 = vmatpush1.bf16.msra.mxu0 %v1038
    %1068 = vmatprep.subr.bf16.mxu0 0
    %1069 = vmatpush1.bf16.msra.mxu0 %v1039
    %1070 = vmatprep.subr.bf16.mxu0 0
    %1071 = vmatpush1.bf16.msra.mxu0 0
    %1072 = vmatprep.subr.bf16.mxu0 0
    %1073 = vmatpush1.bf16.msra.mxu0 0
    %1074 = vmatprep.subr.bf16.mxu0 0
    %1075 = vmatpush1.bf16.msra.mxu0 0
    %1076 = vmatprep.subr.bf16.mxu0 0
    %1077 = vmatpush1.bf16.msra.mxu0 0
    %1078 = vmatprep.subr.bf16.mxu0 0
    %1079 = vmatpush1.bf16.msra.mxu0 0
    %1080 = vmatprep.subr.bf16.mxu0 0
    %1081 = vmatpush1.bf16.msra.mxu0 0
    %1082 = vmatprep.subr.bf16.mxu0 0
    %1083 = vmatpush1.bf16.msra.mxu0 0
    %1084 = vmatprep.subr.bf16.mxu0 0
    %1085 = vmatpush1.bf16.msra.mxu0 0
    %1086 = vmatprep.subr.bf16.mxu0 0
    %1087 = vmatpush1.bf16.msra.mxu0 0
    %1088 = vmatprep.subr.bf16.mxu0 0
    %1089 = vmatpush1.bf16.msra.mxu0 0
    %1090 = vmatprep.subr.bf16.mxu0 0
    %1091 = vmatpush1.bf16.msra.mxu0 0
    %1092 = vmatprep.subr.bf16.mxu0 0
    %1093 = vmatpush1.bf16.msra.mxu0 0
    %1094 = vmatprep.subr.bf16.mxu0 0
    %1095 = vmatpush1.bf16.msra.mxu0 0
    %1096 = vmatprep.subr.bf16.mxu0 0
    %1097 = vmatpush1.bf16.msra.mxu0 0
    %1098 = vmatprep.mubr.bf16.mxu0 0
    %1099 = vmatmul.mubr.bf16.gmra.mrb[0].mxu0 %v1043
    %v1100 = vpop.f32.mrb[0].mxu0
    %v1101 = vadd.f32 0.0, %v1100
    %v1102 = vpop.f32.mrb[0].mxu0
    %v1103 = vpop.f32.mrb[0].mxu0
    %v1104 = vadd.f32 0.0, %v1103
    %v1105 = vpop.f32.mrb[0].mxu0
    %1106 = vmatprep.mubr.bf16.mxu0 0
    %1107 = vmatmul.mubr.bf16.gmra.mrb[0].mxu0 %v1046
    %v1108 = vpop.f32.mrb[0].mxu0
    %v1109 = vadd.f32 0.0, %v1108
    %v1110 = vpop.f32.mrb[0].mxu0
    %v1111 = vpop.f32.mrb[0].mxu0
    %v1112 = vadd.f32 0.0, %v1111
    %v1113 = vpop.f32.mrb[0].mxu0
    %1114 = vmatprep.mubr.bf16.mxu0 0
    %1115 = vmatmul.mubr.bf16.gmra.mrb[0].mxu0 %v1049
    %v1116 = vpop.f32.mrb[0].mxu0
    %v1117 = vadd.f32 0.0, %v1116
    %v1118 = vpop.f32.mrb[0].mxu0
    %v1119 = vpop.f32.mrb[0].mxu0
    %v1120 = vadd.f32 0.0, %v1119
    %v1121 = vpop.f32.mrb[0].mxu0
    %1122 = vmatprep.mubr.bf16.mxu0 0
    %1123 = vmatmul.mubr.bf16.gmra.mrb[0].mxu0 %v1052
    %v1124 = vpop.f32.mrb[0].mxu0
    %v1125 = vadd.f32 0.0, %v1124
    %v1126 = vpop.f32.mrb[0].mxu0
    %v1127 = vpop.f32.mrb[0].mxu0
    %v1128 = vadd.f32 0.0, %v1127
    %v1129 = vpop.f32.mrb[0].mxu0
    %1130 = vmatprep.mubr.bf16.mxu0 0
    %1131 = vmatmul.mubr.bf16.gmra.mrb[0].mxu0 %v1055
    %v1132 = vpop.f32.mrb[0].mxu0
    %v1133 = vadd.f32 0.0, %v1132
    %v1134 = vpop.f32.mrb[0].mxu0
    %v1135 = vpop.f32.mrb[0].mxu0
    %v1136 = vadd.f32 0.0, %v1135
    %v1137 = vpop.f32.mrb[0].mxu0
    %1138 = vmatprep.mubr.bf16.mxu0 0
    %1139 = vmatmul.mubr.bf16.gmra.mrb[0].mxu0 %v1058
    %v1140 = vpop.f32.mrb[0].mxu0
    %v1141 = vadd.f32 0.0, %v1140
    %v1142 = vpop.f32.mrb[0].mxu0
    %v1143 = vpop.f32.mrb[0].mxu0
    %v1144 = vadd.f32 0.0, %v1143
    %v1145 = vpop.f32.mrb[0].mxu0
    %1146 = vmatprep.mubr.bf16.mxu0 0
    %1147 = vmatmul.mubr.bf16.gmra.mrb[0].mxu0 %v1061
    %v1148 = vpop.f32.mrb[0].mxu0
    %v1149 = vadd.f32 0.0, %v1148
    %v1150 = vpop.f32.mrb[0].mxu0
    %v1151 = vpop.f32.mrb[0].mxu0
    %v1152 = vadd.f32 0.0, %v1151
    %v1153 = vpop.f32.mrb[0].mxu0
    %1154 = vmatprep.mubr.bf16.mxu0 0
    %1155 = vmatmul.mubr.bf16.gmra.mrb[0].mxu0 %v1064
    %v1156 = vpop.f32.mrb[0].mxu0
    %v1157 = vadd.f32 0.0, %v1156
    %v1158 = vpop.f32.mrb[0].mxu0
    %v1159 = vpop.f32.mrb[0].mxu0
    %v1160 = vadd.f32 0.0, %v1159
    %v1161 = vpop.f32.mrb[0].mxu0
    %1162 = vdwg.mxu0
    %v1163 = vadd.f32 %v862, %v1101
    %v1164 = vadd.f32 %v863, %v1104
    %v1165 = vadd.f32 %v864, %v1109
    %v1166 = vadd.f32 %v865, %v1112
    %v1167 = vadd.f32 %v866, %v1117
    %v1168 = vadd.f32 %v867, %v1120
    %v1169 = vadd.f32 %v868, %v1125
    %v1170 = vadd.f32 %v869, %v1128
    %v1171 = vadd.f32 %v870, %v1133
    %v1172 = vadd.f32 %v871, %v1136
    %v1173 = vadd.f32 %v872, %v1141
    %v1174 = vadd.f32 %v873, %v1144
    %v1175 = vadd.f32 %v874, %v1149
    %v1176 = vadd.f32 %v875, %v1152
    %v1177 = vadd.f32 %v876, %v1157
    %v1178 = vadd.f32 %v877, %v1160
    %vm1179 = vcmask 1041408
    %vm1180 = vcmask 1045508
    %vm1181 = vmor %vm1179, %vm1180
    %v1182 = vrot.slane %v74, 6
    %v1183 = vrot.slane %v1182, 4
    %v1184 = vrot.slane %v75, 6
    %v1185 = vsel %vm1181, %v1183, %v1184
    %v1186 = vrot.slane %v1184, 4
    %v1187 = vrot.slane %v76, 6
    %v1188 = vsel %vm1181, %v1186, %v1187
    %v1189 = vrot.slane %v77, 6
    %v1190 = vrot.slane %v1189, 4
    %v1191 = vrot.slane %v78, 6
    %v1192 = vsel %vm1181, %v1190, %v1191
    %v1193 = vrot.slane %v1191, 4
    %v1194 = vrot.slane %v79, 6
    %v1195 = vsel %vm1181, %v1193, %v1194
    %v1196 = vrot.slane %v80, 6
    %v1197 = vrot.slane %v1196, 4
    %v1198 = vrot.slane %v81, 6
    %v1199 = vsel %vm1181, %v1197, %v1198
    %v1200 = vrot.slane %v1198, 4
    %v1201 = vrot.slane %v82, 6
    %v1202 = vsel %vm1181, %v1200, %v1201
    %v1203 = vrot.slane %v83, 6
    %v1204 = vrot.slane %v1203, 4
    %v1205 = vrot.slane %v84, 6
    %v1206 = vsel %vm1181, %v1204, %v1205
    %v1207 = vrot.slane %v1205, 4
    %v1208 = vrot.slane %v85, 6
    %v1209 = vsel %vm1181, %v1207, %v1208
    %v1210 = vrot.slane %v86, 6
    %v1211 = vrot.slane %v1210, 4
    %v1212 = vrot.slane %v87, 6
    %v1213 = vsel %vm1181, %v1211, %v1212
    %v1214 = vrot.slane %v1212, 4
    %v1215 = vrot.slane %v88, 6
    %v1216 = vsel %vm1181, %v1214, %v1215
    %v1217 = vrot.slane %v89, 6
    %v1218 = vrot.slane %v1217, 4
    %v1219 = vrot.slane %v90, 6
    %v1220 = vsel %vm1181, %v1218, %v1219
    %v1221 = vrot.slane %v1219, 4
    %v1222 = vrot.slane %v91, 6
    %v1223 = vsel %vm1181, %v1221, %v1222
    %v1224 = vrot.slane %v92, 6
    %v1225 = vrot.slane %v1224, 4
    %v1226 = vrot.slane %v93, 6
    %v1227 = vsel %vm1181, %v1225, %v1226
    %v1228 = vrot.slane %v1226, 4
    %v1229 = vrot.slane %v94, 6
    %v1230 = vsel %vm1181, %v1228, %v1229
    %v1231 = vrot.slane %v95, 6
    %v1232 = vrot.slane %v1231, 4
    %v1233 = vrot.slane %v96, 6
    %v1234 = vsel %vm1181, %v1232, %v1233
    %v1235 = vrot.slane %v1233, 4
    %v1236 = vrot.slane %v97, 6
    %v1237 = vsel %vm1181, %v1235, %v1236
    %s1238 = scalar_lea.vmem [#allocation6], 64
    %v1239 = vld [vmem:[%s1238] sm:$0xf]
    %v1240 = vld [vmem:[%s1238 + $0x4] sm:$0xf]
    %v1241 = vld [vmem:[%s1238 + $0x8] sm:$0xf]
    %v1242 = vld [vmem:[%s1238 + $0xc] sm:$0xf]
    %v1243 = vunpack.c.l.b16 %v1185
    %v1244 = vunpack.c.l.b16 %v1188
    %v1245 = vunpack.c.l.b16 %v1192
    %v1246 = vunpack.c.l.b16 %v1195
    %v1247 = vunpack.c.l.b16 %v1199
    %v1248 = vunpack.c.l.b16 %v1202
    %v1249 = vunpack.c.l.b16 %v1206
    %v1250 = vunpack.c.l.b16 %v1209
    %v1251 = vunpack.c.l.b16 %v1213
    %v1252 = vunpack.c.l.b16 %v1216
    %v1253 = vunpack.c.l.b16 %v1220
    %v1254 = vunpack.c.l.b16 %v1223
    %v1255 = vunpack.c.l.b16 %v1227
    %v1256 = vunpack.c.l.b16 %v1230
    %v1257 = vunpack.c.l.b16 %v1234
    %v1258 = vunpack.c.l.b16 %v1237
    %v1259 = vpack.c.b16 %v1244, %v1243
    %v1260 = vpack.c.b16 %v1246, %v1245
    %v1261 = vpack.c.b16 %v1248, %v1247
    %v1262 = vpack.c.b16 %v1250, %v1249
    %v1263 = vpack.c.b16 %v1252, %v1251
    %v1264 = vpack.c.b16 %v1254, %v1253
    %v1265 = vpack.c.b16 %v1256, %v1255
    %v1266 = vpack.c.b16 %v1258, %v1257
    %v1271 = vunpack.c.l.b16 %v1239
    %v1272 = vunpack.c.l.b16 %v1240
    %v1273 = vunpack.c.l.b16 %v1241
    %v1274 = vunpack.c.l.b16 %v1242
    %v1275 = vpack.c.b16 %v1272, %v1271
    %v1276 = vpack.c.b16 %v1274, %v1273
    %v1280 = vsel %vm338, %v1259, 0
    %v1283 = vsel %vm338, %v1260, 0
    %v1286 = vsel %vm338, %v1261, 0
    %v1289 = vsel %vm338, %v1262, 0
    %v1292 = vsel %vm338, %v1263, 0
    %v1295 = vsel %vm338, %v1264, 0
    %v1298 = vsel %vm338, %v1265, 0
    %v1301 = vsel %vm338, %v1266, 0
    %1303 = vmatprep.subr.bf16.mxu0 0
    %1304 = vmatpush1.bf16.msra.mxu0 %v1275
    %1305 = vmatprep.subr.bf16.mxu0 0
    %1306 = vmatpush1.bf16.msra.mxu0 %v1276
    %1307 = vmatprep.subr.bf16.mxu0 0
    %1308 = vmatpush1.bf16.msra.mxu0 0
    %1309 = vmatprep.subr.bf16.mxu0 0
    %1310 = vmatpush1.bf16.msra.mxu0 0
    %1311 = vmatprep.subr.bf16.mxu0 0
    %1312 = vmatpush1.bf16.msra.mxu0 0
    %1313 = vmatprep.subr.bf16.mxu0 0
    %1314 = vmatpush1.bf16.msra.mxu0 0
    %1315 = vmatprep.subr.bf16.mxu0 0
    %1316 = vmatpush1.bf16.msra.mxu0 0
    %1317 = vmatprep.subr.bf16.mxu0 0
    %1318 = vmatpush1.bf16.msra.mxu0 0
    %1319 = vmatprep.subr.bf16.mxu0 0
    %1320 = vmatpush1.bf16.msra.mxu0 0
    %1321 = vmatprep.subr.bf16.mxu0 0
    %1322 = vmatpush1.bf16.msra.mxu0 0
    %1323 = vmatprep.subr.bf16.mxu0 0
    %1324 = vmatpush1.bf16.msra.mxu0 0
    %1325 = vmatprep.subr.bf16.mxu0 0
    %1326 = vmatpush1.bf16.msra.mxu0 0
    %1327 = vmatprep.subr.bf16.mxu0 0
    %1328 = vmatpush1.bf16.msra.mxu0 0
    %1329 = vmatprep.subr.bf16.mxu0 0
    %1330 = vmatpush1.bf16.msra.mxu0 0
    %1331 = vmatprep.subr.bf16.mxu0 0
    %1332 = vmatpush1.bf16.msra.mxu0 0
    %1333 = vmatprep.subr.bf16.mxu0 0
    %1334 = vmatpush1.bf16.msra.mxu0 0
    %1335 = vmatprep.mubr.bf16.mxu0 0
    %1336 = vmatmul.mubr.bf16.gmra.mrb[0].mxu0 %v1280
    %v1337 = vpop.f32.mrb[0].mxu0
    %v1338 = vadd.f32 0.0, %v1337
    %v1339 = vpop.f32.mrb[0].mxu0
    %v1340 = vpop.f32.mrb[0].mxu0
    %v1341 = vadd.f32 0.0, %v1340
    %v1342 = vpop.f32.mrb[0].mxu0
    %1343 = vmatprep.mubr.bf16.mxu0 0
    %1344 = vmatmul.mubr.bf16.gmra.mrb[0].mxu0 %v1283
    %v1345 = vpop.f32.mrb[0].mxu0
    %v1346 = vadd.f32 0.0, %v1345
    %v1347 = vpop.f32.mrb[0].mxu0
    %v1348 = vpop.f32.mrb[0].mxu0
    %v1349 = vadd.f32 0.0, %v1348
    %v1350 = vpop.f32.mrb[0].mxu0
    %1351 = vmatprep.mubr.bf16.mxu0 0
    %1352 = vmatmul.mubr.bf16.gmra.mrb[0].mxu0 %v1286
    %v1353 = vpop.f32.mrb[0].mxu0
    %v1354 = vadd.f32 0.0, %v1353
    %v1355 = vpop.f32.mrb[0].mxu0
    %v1356 = vpop.f32.mrb[0].mxu0
    %v1357 = vadd.f32 0.0, %v1356
    %v1358 = vpop.f32.mrb[0].mxu0
    %1359 = vmatprep.mubr.bf16.mxu0 0
    %1360 = vmatmul.mubr.bf16.gmra.mrb[0].mxu0 %v1289
    %v1361 = vpop.f32.mrb[0].mxu0
    %v1362 = vadd.f32 0.0, %v1361
    %v1363 = vpop.f32.mrb[0].mxu0
    %v1364 = vpop.f32.mrb[0].mxu0
    %v1365 = vadd.f32 0.0, %v1364
    %v1366 = vpop.f32.mrb[0].mxu0
    %1367 = vmatprep.mubr.bf16.mxu0 0
    %1368 = vmatmul.mubr.bf16.gmra.mrb[0].mxu0 %v1292
    %v1369 = vpop.f32.mrb[0].mxu0
    %v1370 = vadd.f32 0.0, %v1369
    %v1371 = vpop.f32.mrb[0].mxu0
    %v1372 = vpop.f32.mrb[0].mxu0
    %v1373 = vadd.f32 0.0, %v1372
    %v1374 = vpop.f32.mrb[0].mxu0
    %1375 = vmatprep.mubr.bf16.mxu0 0
    %1376 = vmatmul.mubr.bf16.gmra.mrb[0].mxu0 %v1295
    %v1377 = vpop.f32.mrb[0].mxu0
    %v1378 = vadd.f32 0.0, %v1377
    %v1379 = vpop.f32.mrb[0].mxu0
    %v1380 = vpop.f32.mrb[0].mxu0
    %v1381 = vadd.f32 0.0, %v1380
    %v1382 = vpop.f32.mrb[0].mxu0
    %1383 = vmatprep.mubr.bf16.mxu0 0
    %1384 = vmatmul.mubr.bf16.gmra.mrb[0].mxu0 %v1298
    %v1385 = vpop.f32.mrb[0].mxu0
    %v1386 = vadd.f32 0.0, %v1385
    %v1387 = vpop.f32.mrb[0].mxu0
    %v1388 = vpop.f32.mrb[0].mxu0
    %v1389 = vadd.f32 0.0, %v1388
    %v1390 = vpop.f32.mrb[0].mxu0
    %1391 = vmatprep.mubr.bf16.mxu0 0
    %1392 = vmatmul.mubr.bf16.gmra.mrb[0].mxu0 %v1301
    %v1393 = vpop.f32.mrb[0].mxu0
    %v1394 = vadd.f32 0.0, %v1393
    %v1395 = vpop.f32.mrb[0].mxu0
    %v1396 = vpop.f32.mrb[0].mxu0
    %v1397 = vadd.f32 0.0, %v1396
    %v1398 = vpop.f32.mrb[0].mxu0
    %1399 = vdwg.mxu0
    %v1400 = vadd.f32 %v1163, %v1338
    %v1401 = vadd.f32 %v1164, %v1341
    %v1402 = vadd.f32 %v1165, %v1346
    %v1403 = vadd.f32 %v1166, %v1349
    %v1404 = vadd.f32 %v1167, %v1354
    %v1405 = vadd.f32 %v1168, %v1357
    %v1406 = vadd.f32 %v1169, %v1362
    %v1407 = vadd.f32 %v1170, %v1365
    %v1408 = vadd.f32 %v1171, %v1370
    %v1409 = vadd.f32 %v1172, %v1373
    %v1410 = vadd.f32 %v1173, %v1378
    %v1411 = vadd.f32 %v1174, %v1381
    %v1412 = vadd.f32 %v1175, %v1386
    %v1413 = vadd.f32 %v1176, %v1389
    %v1414 = vadd.f32 %v1177, %v1394
    %v1415 = vadd.f32 %v1178, %v1397
    %v1416 = vld [vmem:[%s3] sm:$0x1]
    %v1418 = vlaneseq
    %v1419 = vshrl.u32 %v1418, 7
    %v1420 = vsub.s32 0, %v1419
    %v1421 = vrot.slane %v1416, %v1420
    %v1423 = vadd.f32 %v1400, %v1421
    %v1424 = vadd.f32 %v1401, %v1421
    %v1425 = vadd.f32 %v1402, %v1421
    %v1426 = vadd.f32 %v1403, %v1421
    %v1427 = vadd.f32 %v1404, %v1421
    %v1428 = vadd.f32 %v1405, %v1421
    %v1429 = vadd.f32 %v1406, %v1421
    %v1430 = vadd.f32 %v1407, %v1421
    %v1431 = vadd.f32 %v1408, %v1421
    %v1432 = vadd.f32 %v1409, %v1421
    %v1433 = vadd.f32 %v1410, %v1421
    %v1434 = vadd.f32 %v1411, %v1421
    %v1435 = vadd.f32 %v1412, %v1421
    %v1436 = vadd.f32 %v1413, %v1421
    %v1437 = vadd.f32 %v1414, %v1421
    %v1438 = vadd.f32 %v1415, %v1421
    %v1439 = vmax.f32 %v1423, 0.0
    %v1440 = vmax.f32 %v1424, 0.0
    %v1441 = vmax.f32 %v1425, 0.0
    %v1442 = vmax.f32 %v1426, 0.0
    %v1443 = vmax.f32 %v1427, 0.0
    %v1444 = vmax.f32 %v1428, 0.0
    %v1445 = vmax.f32 %v1429, 0.0
    %v1446 = vmax.f32 %v1430, 0.0
    %v1447 = vmax.f32 %v1431, 0.0
    %v1448 = vmax.f32 %v1432, 0.0
    %v1449 = vmax.f32 %v1433, 0.0
    %v1450 = vmax.f32 %v1434, 0.0
    %v1451 = vmax.f32 %v1435, 0.0
    %v1452 = vmax.f32 %v1436, 0.0
    %v1453 = vmax.f32 %v1437, 0.0
    %v1454 = vmax.f32 %v1438, 0.0
    %v1455 = vpack.c.bf16 %v1440, %v1439
    %v1456 = vpack.c.bf16 %v1442, %v1441
    %v1457 = vpack.c.bf16 %v1444, %v1443
    %v1458 = vpack.c.bf16 %v1446, %v1445
    %v1459 = vpack.c.bf16 %v1448, %v1447
    %v1460 = vpack.c.bf16 %v1450, %v1449
    %v1461 = vpack.c.bf16 %v1452, %v1451
    %v1462 = vpack.c.bf16 %v1454, %v1453
    %v1463 = vld [vmem:[#allocation8] sm:$0xf]
    %v1464 = vld [vmem:[#allocation8 + $0x4] sm:$0xf]
    %v1465 = vld [vmem:[#allocation8 + $0x8] sm:$0xf]
    %v1466 = vld [vmem:[#allocation8 + $0xc] sm:$0xf]
    %v1467 = vld [vmem:[#allocation8 + $0x10] sm:$0xf]
    %v1468 = vld [vmem:[#allocation8 + $0x14] sm:$0xf]
    %v1469 = vld [vmem:[#allocation8 + $0x18] sm:$0xf]
    %v1470 = vld [vmem:[#allocation8 + $0x1c] sm:$0xf]
    %v1471 = vld [vmem:[#allocation8 + $0x20] sm:$0xf]
    %v1472 = vld [vmem:[#allocation8 + $0x24] sm:$0xf]
    %v1473 = vld [vmem:[#allocation8 + $0x28] sm:$0xf]
    %v1474 = vld [vmem:[#allocation8 + $0x2c] sm:$0xf]
    %v1475 = vld [vmem:[#allocation8 + $0x30] sm:$0xf]
    %v1476 = vld [vmem:[#allocation8 + $0x34] sm:$0xf]
    %v1477 = vld [vmem:[#allocation8 + $0x38] sm:$0xf]
    %v1478 = vld [vmem:[#allocation8 + $0x3c] sm:$0xf]
    %v1479 = vld [vmem:[%s5] sm:$0x1]
    %v1481 = vlaneseq
    %v1482 = vshrl.u32 %v1481, 7
    %v1483 = vsub.s32 0, %v1482
    %v1484 = vrot.slane %v1479, %v1483
    %v1502 = vunpack.c.l.b16 %v1463
    %v1503 = vunpack.c.l.b16 %v1464
    %v1504 = vunpack.c.l.b16 %v1465
    %v1505 = vunpack.c.l.b16 %v1466
    %v1506 = vunpack.c.l.b16 %v1467
    %v1507 = vunpack.c.l.b16 %v1468
    %v1508 = vunpack.c.l.b16 %v1469
    %v1509 = vunpack.c.l.b16 %v1470
    %v1510 = vunpack.c.l.b16 %v1471
    %v1511 = vunpack.c.l.b16 %v1472
    %v1512 = vunpack.c.l.b16 %v1473
    %v1513 = vunpack.c.l.b16 %v1474
    %v1514 = vunpack.c.l.b16 %v1475
    %v1515 = vunpack.c.l.b16 %v1476
    %v1516 = vunpack.c.l.b16 %v1477
    %v1517 = vunpack.c.l.b16 %v1478
    %v1518 = vpack.c.b16 %v1503, %v1502
    %v1519 = vpack.c.b16 %v1505, %v1504
    %v1520 = vpack.c.b16 %v1507, %v1506
    %v1521 = vpack.c.b16 %v1509, %v1508
    %v1522 = vpack.c.b16 %v1511, %v1510
    %v1523 = vpack.c.b16 %v1513, %v1512
    %v1524 = vpack.c.b16 %v1515, %v1514
    %v1525 = vpack.c.b16 %v1517, %v1516
    %1534 = vmatprep.subr.bf16.mxu0 0
    %1535 = vmatpush1.bf16.msra.mxu0 %v1518
    %1536 = vmatprep.subr.bf16.mxu0 0
    %1537 = vmatpush1.bf16.msra.mxu0 %v1519
    %1538 = vmatprep.subr.bf16.mxu0 0
    %1539 = vmatpush1.bf16.msra.mxu0 %v1520
    %1540 = vmatprep.subr.bf16.mxu0 0
    %1541 = vmatpush1.bf16.msra.mxu0 %v1521
    %1542 = vmatprep.subr.bf16.mxu0 0
    %1543 = vmatpush1.bf16.msra.mxu0 %v1522
    %1544 = vmatprep.subr.bf16.mxu0 0
    %1545 = vmatpush1.bf16.msra.mxu0 %v1523
    %1546 = vmatprep.subr.bf16.mxu0 0
    %1547 = vmatpush1.bf16.msra.mxu0 %v1524
    %1548 = vmatprep.subr.bf16.mxu0 0
    %1549 = vmatpush1.bf16.msra.mxu0 %v1525
    %1550 = vmatprep.subr.bf16.mxu0 0
    %1551 = vmatpush1.bf16.msra.mxu0 0
    %1552 = vmatprep.subr.bf16.mxu0 0
    %1553 = vmatpush1.bf16.msra.mxu0 0
    %1554 = vmatprep.subr.bf16.mxu0 0
    %1555 = vmatpush1.bf16.msra.mxu0 0
    %1556 = vmatprep.subr.bf16.mxu0 0
    %1557 = vmatpush1.bf16.msra.mxu0 0
    %1558 = vmatprep.subr.bf16.mxu0 0
    %1559 = vmatpush1.bf16.msra.mxu0 0
    %1560 = vmatprep.subr.bf16.mxu0 0
    %1561 = vmatpush1.bf16.msra.mxu0 0
    %1562 = vmatprep.subr.bf16.mxu0 0
    %1563 = vmatpush1.bf16.msra.mxu0 0
    %1564 = vmatprep.subr.bf16.mxu0 0
    %1565 = vmatpush1.bf16.msra.mxu0 0
    %1566 = vmatprep.mubr.bf16.mxu0 0
    %1567 = vmatmul.mubr.bf16.gmra.mrb[0].mxu0 %v1455
    %v1568 = vpop.f32.mrb[0].mxu0
    %v1569 = vadd.f32 %v1484, %v1568
    %v1570 = vpop.f32.mrb[0].mxu0
    %v1571 = vpop.f32.mrb[0].mxu0
    %v1572 = vadd.f32 %v1484, %v1571
    %v1573 = vpop.f32.mrb[0].mxu0
    %1574 = vmatprep.mubr.bf16.mxu0 0
    %1575 = vmatmul.mubr.bf16.gmra.mrb[0].mxu0 %v1456
    %v1576 = vpop.f32.mrb[0].mxu0
    %v1577 = vadd.f32 %v1484, %v1576
    %v1578 = vpop.f32.mrb[0].mxu0
    %v1579 = vpop.f32.mrb[0].mxu0
    %v1580 = vadd.f32 %v1484, %v1579
    %v1581 = vpop.f32.mrb[0].mxu0
    %1582 = vmatprep.mubr.bf16.mxu0 0
    %1583 = vmatmul.mubr.bf16.gmra.mrb[0].mxu0 %v1457
    %v1584 = vpop.f32.mrb[0].mxu0
    %v1585 = vadd.f32 %v1484, %v1584
    %v1586 = vpop.f32.mrb[0].mxu0
    %v1587 = vpop.f32.mrb[0].mxu0
    %v1588 = vadd.f32 %v1484, %v1587
    %v1589 = vpop.f32.mrb[0].mxu0
    %1590 = vmatprep.mubr.bf16.mxu0 0
    %1591 = vmatmul.mubr.bf16.gmra.mrb[0].mxu0 %v1458
    %v1592 = vpop.f32.mrb[0].mxu0
    %v1593 = vadd.f32 %v1484, %v1592
    %v1594 = vpop.f32.mrb[0].mxu0
    %v1595 = vpop.f32.mrb[0].mxu0
    %v1596 = vadd.f32 %v1484, %v1595
    %v1597 = vpop.f32.mrb[0].mxu0
    %1598 = vmatprep.mubr.bf16.mxu0 0
    %1599 = vmatmul.mubr.bf16.gmra.mrb[0].mxu0 %v1459
    %v1600 = vpop.f32.mrb[0].mxu0
    %v1601 = vadd.f32 %v1484, %v1600
    %v1602 = vpop.f32.mrb[0].mxu0
    %v1603 = vpop.f32.mrb[0].mxu0
    %v1604 = vadd.f32 %v1484, %v1603
    %v1605 = vpop.f32.mrb[0].mxu0
    %1606 = vmatprep.mubr.bf16.mxu0 0
    %1607 = vmatmul.mubr.bf16.gmra.mrb[0].mxu0 %v1460
    %v1608 = vpop.f32.mrb[0].mxu0
    %v1609 = vadd.f32 %v1484, %v1608
    %v1610 = vpop.f32.mrb[0].mxu0
    %v1611 = vpop.f32.mrb[0].mxu0
    %v1612 = vadd.f32 %v1484, %v1611
    %v1613 = vpop.f32.mrb[0].mxu0
    %1614 = vmatprep.mubr.bf16.mxu0 0
    %1615 = vmatmul.mubr.bf16.gmra.mrb[0].mxu0 %v1461
    %v1616 = vpop.f32.mrb[0].mxu0
    %v1617 = vadd.f32 %v1484, %v1616
    %v1618 = vpop.f32.mrb[0].mxu0
    %v1619 = vpop.f32.mrb[0].mxu0
    %v1620 = vadd.f32 %v1484, %v1619
    %v1621 = vpop.f32.mrb[0].mxu0
    %1622 = vmatprep.mubr.bf16.mxu0 0
    %1623 = vmatmul.mubr.bf16.gmra.mrb[0].mxu0 %v1462
    %v1624 = vpop.f32.mrb[0].mxu0
    %v1625 = vadd.f32 %v1484, %v1624
    %v1626 = vpop.f32.mrb[0].mxu0
    %v1627 = vpop.f32.mrb[0].mxu0
    %v1628 = vadd.f32 %v1484, %v1627
    %v1629 = vpop.f32.mrb[0].mxu0
    %1630 = vdwg.mxu0
    %v1631 = vtanh.pop %v1569
    %v1632 = vtanh.pop %v1572
    %v1633 = vtanh.pop %v1577
    %v1634 = vtanh.pop %v1580
    %v1635 = vtanh.pop %v1585
    %v1636 = vtanh.pop %v1588
    %v1637 = vtanh.pop %v1593
    %v1638 = vtanh.pop %v1596
    %v1639 = vtanh.pop %v1601
    %v1640 = vtanh.pop %v1604
    %v1641 = vtanh.pop %v1609
    %v1642 = vtanh.pop %v1612
    %v1643 = vtanh.pop %v1617
    %v1644 = vtanh.pop %v1620
    %v1645 = vtanh.pop %v1625
    %v1646 = vtanh.pop %v1628
    %v1647 = vld [vmem:[%s6] sm:$0x1]
    %v1649 = vlaneseq
    %v1650 = vshrl.u32 %v1649, 7
    %v1651 = vsub.s32 0, %v1650
    %v1652 = vrot.slane %v1647, %v1651
    %v1654 = vmul.f32 %v1631, %v1652
    %v1655 = vmul.f32 %v1632, %v1652
    %v1656 = vmul.f32 %v1633, %v1652
    %v1657 = vmul.f32 %v1634, %v1652
    %v1658 = vmul.f32 %v1635, %v1652
    %v1659 = vmul.f32 %v1636, %v1652
    %v1660 = vmul.f32 %v1637, %v1652
    %v1661 = vmul.f32 %v1638, %v1652
    %v1662 = vmul.f32 %v1639, %v1652
    %v1663 = vmul.f32 %v1640, %v1652
    %v1664 = vmul.f32 %v1641, %v1652
    %v1665 = vmul.f32 %v1642, %v1652
    %v1666 = vmul.f32 %v1643, %v1652
    %v1667 = vmul.f32 %v1644, %v1652
    %v1668 = vmul.f32 %v1645, %v1652
    %v1669 = vmul.f32 %v1646, %v1652
    %1670 = vadd.xlane.f32.xlu0 %v1654
    %v1671 = vpop.xlane.xlu0 %1670
    %1672 = vadd.xlane.f32.xlu0 %v1655
    %v1673 = vpop.xlane.xlu0 %1672
    %1674 = vadd.xlane.f32.xlu0 %v1656
    %v1675 = vpop.xlane.xlu0 %1674
    %1676 = vadd.xlane.f32.xlu0 %v1657
    %v1677 = vpop.xlane.xlu0 %1676
    %1678 = vadd.xlane.f32.xlu0 %v1658
    %v1679 = vpop.xlane.xlu0 %1678
    %1680 = vadd.xlane.f32.xlu0 %v1659
    %v1681 = vpop.xlane.xlu0 %1680
    %1682 = vadd.xlane.f32.xlu0 %v1660
    %v1683 = vpop.xlane.xlu0 %1682
    %1684 = vadd.xlane.f32.xlu0 %v1661
    %v1685 = vpop.xlane.xlu0 %1684
    %1686 = vadd.xlane.f32.xlu0 %v1662
    %v1687 = vpop.xlane.xlu0 %1686
    %1688 = vadd.xlane.f32.xlu0 %v1663
    %v1689 = vpop.xlane.xlu0 %1688
    %1690 = vadd.xlane.f32.xlu0 %v1664
    %v1691 = vpop.xlane.xlu0 %1690
    %1692 = vadd.xlane.f32.xlu0 %v1665
    %v1693 = vpop.xlane.xlu0 %1692
    %1694 = vadd.xlane.f32.xlu0 %v1666
    %v1695 = vpop.xlane.xlu0 %1694
    %1696 = vadd.xlane.f32.xlu0 %v1667
    %v1697 = vpop.xlane.xlu0 %1696
    %1698 = vadd.xlane.f32.xlu0 %v1668
    %v1699 = vpop.xlane.xlu0 %1698
    %1700 = vadd.xlane.f32.xlu0 %v1669
    %v1701 = vpop.xlane.xlu0 %1700
    %v1702 = vld [vmem:[#allocation2] sm:$0x1]
    %v1704 = vlaneseq
    %v1705 = vshrl.u32 %v1704, 7
    %v1706 = vsub.s32 0, %v1705
    %v1707 = vrot.slane %v1702, %v1706
    %v1709 = vadd.f32 %v1671, %v1707
    %v1710 = vadd.f32 %v1673, %v1707
    %v1711 = vadd.f32 %v1675, %v1707
    %v1712 = vadd.f32 %v1677, %v1707
    %v1713 = vadd.f32 %v1679, %v1707
    %v1714 = vadd.f32 %v1681, %v1707
    %v1715 = vadd.f32 %v1683, %v1707
    %v1716 = vadd.f32 %v1685, %v1707
    %v1717 = vadd.f32 %v1687, %v1707
    %v1718 = vadd.f32 %v1689, %v1707
    %v1719 = vadd.f32 %v1691, %v1707
    %v1720 = vadd.f32 %v1693, %v1707
    %v1721 = vadd.f32 %v1695, %v1707
    %v1722 = vadd.f32 %v1697, %v1707
    %v1723 = vadd.f32 %v1699, %v1707
    %v1724 = vadd.f32 %v1701, %v1707
    %v1725 = vmul.f32 %v1709, 1.442695
    %v1726 = vpow.pop %v1725
    %v1727 = vmul.f32 %v1710, 1.442695
    %v1728 = vpow.pop %v1727
    %v1729 = vmul.f32 %v1711, 1.442695
    %v1730 = vpow.pop %v1729
    %v1731 = vmul.f32 %v1712, 1.442695
    %v1732 = vpow.pop %v1731
    %v1733 = vmul.f32 %v1713, 1.442695
    %v1734 = vpow.pop %v1733
    %v1735 = vmul.f32 %v1714, 1.442695
    %v1736 = vpow.pop %v1735
    %v1737 = vmul.f32 %v1715, 1.442695
    %v1738 = vpow.pop %v1737
    %v1739 = vmul.f32 %v1716, 1.442695
    %v1740 = vpow.pop %v1739
    %v1741 = vmul.f32 %v1717, 1.442695
    %v1742 = vpow.pop %v1741
    %v1743 = vmul.f32 %v1718, 1.442695
    %v1744 = vpow.pop %v1743
    %v1745 = vmul.f32 %v1719, 1.442695
    %v1746 = vpow.pop %v1745
    %v1747 = vmul.f32 %v1720, 1.442695
    %v1748 = vpow.pop %v1747
    %v1749 = vmul.f32 %v1721, 1.442695
    %v1750 = vpow.pop %v1749
    %v1751 = vmul.f32 %v1722, 1.442695
    %v1752 = vpow.pop %v1751
    %v1753 = vmul.f32 %v1723, 1.442695
    %v1754 = vpow.pop %v1753
    %v1755 = vmul.f32 %v1724, 1.442695
    %v1756 = vpow.pop %v1755
    %v1757 = vlaneseq
    %v1758 = vshrl.u32 %v1757, 7
    %v1759 = vlaneseq
    %v1760 = vand.u32 %v1759, 127
    %v1761 = vmul.u32 %v1758, 16
    %v1762 = vsub.s32 %v1760, %v1761
    %vm1763 = vcmp.ge.s32.totalorder %v1762, 0
    %vm1764 = vcmp.lt.s32.totalorder %v1762, 16
    %vm1765 = vmand %vm1763, %vm1764
    %v1766 = vld [vmem:[%s1] sm:$0xff]
    %1767 = vset.pattern.permute.xlu0 0
    %1768 = vperm.xlu0 %1767, %v1766
    %v1769 = vpop.permute.xlu0 %1768
    %vm1770 = vcmp.lt.s32.totalorder %v1762, %v1769
    %vm1771 = vmand %vm1765, %vm1770
    %v1772 = vsel %vm1771, 1, 0
    %v1773 = vcvt.s32.f32 %v1772
    %v1774 = vpack.c.bf16 %v1773, %v1773
    %v1775 = vpack.c.bf16 %v1728, %v1726
    %v1776 = vpack.c.bf16 %v1732, %v1730
    %v1777 = vpack.c.bf16 %v1736, %v1734
    %v1778 = vpack.c.bf16 %v1740, %v1738
    %v1779 = vpack.c.bf16 %v1744, %v1742
    %v1780 = vpack.c.bf16 %v1748, %v1746
    %v1781 = vpack.c.bf16 %v1752, %v1750
    %v1782 = vpack.c.bf16 %v1756, %v1754
    %1783 = vmatprep.subr.bf16.mxu0 0
    %1784 = vmatpush1.bf16.msra.mxu0 %v1775
    %1785 = vmatprep.subr.bf16.mxu0 0
    %1786 = vmatpush1.bf16.msra.mxu0 %v1776
    %1787 = vmatprep.subr.bf16.mxu0 0
    %1788 = vmatpush1.bf16.msra.mxu0 %v1777
    %1789 = vmatprep.subr.bf16.mxu0 0
    %1790 = vmatpush1.bf16.msra.mxu0 %v1778
    %1791 = vmatprep.subr.bf16.mxu0 0
    %1792 = vmatpush1.bf16.msra.mxu0 %v1779
    %1793 = vmatprep.subr.bf16.mxu0 0
    %1794 = vmatpush1.bf16.msra.mxu0 %v1780
    %1795 = vmatprep.subr.bf16.mxu0 0
    %1796 = vmatpush1.bf16.msra.mxu0 %v1781
    %1797 = vmatprep.subr.bf16.mxu0 0
    %1798 = vmatpush1.bf16.msra.mxu0 %v1782
    %1799 = vmatprep.subr.bf16.mxu0 0
    %1800 = vmatpush1.bf16.msra.mxu0 0
    %1801 = vmatprep.subr.bf16.mxu0 0
    %1802 = vmatpush1.bf16.msra.mxu0 0
    %1803 = vmatprep.subr.bf16.mxu0 0
    %1804 = vmatpush1.bf16.msra.mxu0 0
    %1805 = vmatprep.subr.bf16.mxu0 0
    %1806 = vmatpush1.bf16.msra.mxu0 0
    %1807 = vmatprep.subr.bf16.mxu0 0
    %1808 = vmatpush1.bf16.msra.mxu0 0
    %1809 = vmatprep.subr.bf16.mxu0 0
    %1810 = vmatpush1.bf16.msra.mxu0 0
    %1811 = vmatprep.subr.bf16.mxu0 0
    %1812 = vmatpush1.bf16.msra.mxu0 0
    %1813 = vmatprep.subr.bf16.mxu0 0
    %1814 = vmatpush1.bf16.msra.mxu0 0
    %1815 = vmatprep.mubr.bf16.mxu0 0
    %1816 = vmatmul.mubr.bf16.gmra.mrb[0].mxu0 %v1774
    %v1817 = vpop.f32.mrb[0].mxu0
    %v1818 = vadd.f32 0.0, %v1817
    %v1819 = vpop.f32.mrb[0].mxu0
    %v1820 = vpop.f32.mrb[0].mxu0
    %v1821 = vpop.f32.mrb[0].mxu0
    %1822 = vdwg.mxu0
    %1824 = vset.pattern.permute.xlu0 0
    %1825 = vperm.xlu0 %1824, %v1726
    %v1826 = vpop.permute.xlu0 %1825
    %1829 = vset.pattern.permute.xlu0 0
    %1830 = vperm.xlu0 %1829, %v1728
    %v1831 = vpop.permute.xlu0 %1830
    %1834 = vset.pattern.permute.xlu0 0
    %1835 = vperm.xlu0 %1834, %v1730
    %v1836 = vpop.permute.xlu0 %1835
    %1839 = vset.pattern.permute.xlu0 0
    %1840 = vperm.xlu0 %1839, %v1732
    %v1841 = vpop.permute.xlu0 %1840
    %1844 = vset.pattern.permute.xlu0 0
    %1845 = vperm.xlu0 %1844, %v1734
    %v1846 = vpop.permute.xlu0 %1845
    %1849 = vset.pattern.permute.xlu0 0
    %1850 = vperm.xlu0 %1849, %v1736
    %v1851 = vpop.permute.xlu0 %1850
    %1854 = vset.pattern.permute.xlu0 0
    %1855 = vperm.xlu0 %1854, %v1738
    %v1856 = vpop.permute.xlu0 %1855
    %1859 = vset.pattern.permute.xlu0 0
    %1860 = vperm.xlu0 %1859, %v1740
    %v1861 = vpop.permute.xlu0 %1860
    %1864 = vset.pattern.permute.xlu0 0
    %1865 = vperm.xlu0 %1864, %v1742
    %v1866 = vpop.permute.xlu0 %1865
    %1869 = vset.pattern.permute.xlu0 0
    %1870 = vperm.xlu0 %1869, %v1744
    %v1871 = vpop.permute.xlu0 %1870
    %1874 = vset.pattern.permute.xlu0 0
    %1875 = vperm.xlu0 %1874, %v1746
    %v1876 = vpop.permute.xlu0 %1875
    %1879 = vset.pattern.permute.xlu0 0
    %1880 = vperm.xlu0 %1879, %v1748
    %v1881 = vpop.permute.xlu0 %1880
    %1884 = vset.pattern.permute.xlu0 0
    %1885 = vperm.xlu0 %1884, %v1750
    %v1886 = vpop.permute.xlu0 %1885
    %1889 = vset.pattern.permute.xlu0 0
    %1890 = vperm.xlu0 %1889, %v1752
    %v1891 = vpop.permute.xlu0 %1890
    %1894 = vset.pattern.permute.xlu0 0
    %1895 = vperm.xlu0 %1894, %v1754
    %v1896 = vpop.permute.xlu0 %1895
    %1899 = vset.pattern.permute.xlu0 0
    %1900 = vperm.xlu0 %1899, %v1756
    %v1901 = vpop.permute.xlu0 %1900
    %v1903 = vmul.f32 %v1826, %v1439
    %v1904 = vmul.f32 %v1831, %v1440
    %v1905 = vmul.f32 %v1836, %v1441
    %v1906 = vmul.f32 %v1841, %v1442
    %v1907 = vmul.f32 %v1846, %v1443
    %v1908 = vmul.f32 %v1851, %v1444
    %v1909 = vmul.f32 %v1856, %v1445
    %v1910 = vmul.f32 %v1861, %v1446
    %v1911 = vmul.f32 %v1866, %v1447
    %v1912 = vmul.f32 %v1871, %v1448
    %v1913 = vmul.f32 %v1876, %v1449
    %v1914 = vmul.f32 %v1881, %v1450
    %v1915 = vmul.f32 %v1886, %v1451
    %v1916 = vmul.f32 %v1891, %v1452
    %v1917 = vmul.f32 %v1896, %v1453
    %v1918 = vmul.f32 %v1901, %v1454
    %v1919 = vpack.c.bf16 %v1904, %v1903
    %v1920 = vpack.c.bf16 %v1906, %v1905
    %v1921 = vpack.c.bf16 %v1908, %v1907
    %v1922 = vpack.c.bf16 %v1910, %v1909
    %v1923 = vpack.c.bf16 %v1912, %v1911
    %v1924 = vpack.c.bf16 %v1914, %v1913
    %v1925 = vpack.c.bf16 %v1916, %v1915
    %v1926 = vpack.c.bf16 %v1918, %v1917
    %1927 = vmatprep.subr.bf16.mxu0 0
    %1928 = vmatpush1.bf16.msra.mxu0 %v1919
    %1929 = vmatprep.subr.bf16.mxu0 0
    %1930 = vmatpush1.bf16.msra.mxu0 %v1920
    %1931 = vmatprep.subr.bf16.mxu0 0
    %1932 = vmatpush1.bf16.msra.mxu0 %v1921
    %1933 = vmatprep.subr.bf16.mxu0 0
    %1934 = vmatpush1.bf16.msra.mxu0 %v1922
    %1935 = vmatprep.subr.bf16.mxu0 0
    %1936 = vmatpush1.bf16.msra.mxu0 %v1923
    %1937 = vmatprep.subr.bf16.mxu0 0
    %1938 = vmatpush1.bf16.msra.mxu0 %v1924
    %1939 = vmatprep.subr.bf16.mxu0 0
    %1940 = vmatpush1.bf16.msra.mxu0 %v1925
    %1941 = vmatprep.subr.bf16.mxu0 0
    %1942 = vmatpush1.bf16.msra.mxu0 %v1926
    %1943 = vmatprep.subr.bf16.mxu0 0
    %1944 = vmatpush1.bf16.msra.mxu0 0
    %1945 = vmatprep.subr.bf16.mxu0 0
    %1946 = vmatpush1.bf16.msra.mxu0 0
    %1947 = vmatprep.subr.bf16.mxu0 0
    %1948 = vmatpush1.bf16.msra.mxu0 0
    %1949 = vmatprep.subr.bf16.mxu0 0
    %1950 = vmatpush1.bf16.msra.mxu0 0
    %1951 = vmatprep.subr.bf16.mxu0 0
    %1952 = vmatpush1.bf16.msra.mxu0 0
    %1953 = vmatprep.subr.bf16.mxu0 0
    %1954 = vmatpush1.bf16.msra.mxu0 0
    %1955 = vmatprep.subr.bf16.mxu0 0
    %1956 = vmatpush1.bf16.msra.mxu0 0
    %1957 = vmatprep.subr.bf16.mxu0 0
    %1958 = vmatpush1.bf16.msra.mxu0 0
    %1959 = vmatprep.mubr.bf16.mxu0 0
    %1960 = vmatmul.mubr.bf16.gmra.mrb[0].mxu0 %v1774
    %v1961 = vpop.f32.mrb[0].mxu0
    %v1962 = vadd.f32 0.0, %v1961
    %v1963 = vpop.f32.mrb[0].mxu0
    %v1964 = vpop.f32.mrb[0].mxu0
    %v1965 = vpop.f32.mrb[0].mxu0
    %1966 = vdwg.mxu0
    %v1967 = vrcp.pop %v1818
    %1969 = vset.pattern.permute.xlu0 0
    %1970 = vperm.xlu0 %1969, %v1967
    %v1971 = vpop.permute.xlu0 %1970
    %v1973 = vmul.f32 %v1962, %v1971
    %1974 = vst [vmem:[#allocation9] sm:$0xff] %v1973
    // Predicated region
    $region46: #{tpu_custom_call.1} parent=1 // pred_check
      _
    $region47: #{tpu_custom_call.1} parent=1 // pred_check_branch
      %1976 = sbr.rel (0) target = $region49
    $region48: #{tpu_custom_call.1} parent=1 // pred_region
      %s1978 = ssub.s32 128, 128
      %1979 = vsyncadd [#allocation5], %s1978
      %s1981 = sshll.u32 [#allocation9], 4
      %s1982 = int_to_ptr.vmem [resolvable:$true] %s1981
      %1984 = dma.vmem_to_hbm [thread:$0]  %s1982, 128, %s8, [#allocation5]
    $region49: #{tpu_custom_call.1} parent=1 // pred_fallthru
      _
    // Predicated region
    $region50: #{tpu_custom_call.1} parent=1 // pred_check
      _
    $region51: #{tpu_custom_call.1} parent=1 // pred_check_branch
      %1986 = sbr.rel (0) target = $region53
    $region52: #{tpu_custom_call.1} parent=1 // pred_region
      %1987 = dma.done [#allocation5], 128
    $region53: #{tpu_custom_call.1} parent=1 // pred_fallthru
      _
    %1988 = vsyncpa [#allocation4], 1
    %1989 = vsyncpa [#allocation7], 1
    %1990 = vsyncpa [#allocation5], 1

</llo_original>
